<compile_context>
chip_gen: v7x
topology: tpu7x:2x2x1
jax: 0.10.0
libtpu: 0.0.40
codegen_flags: <defaults>
</compile_context>

<pallas_src>
import jax
import jax.numpy as jnp
from jax import lax
from jax.experimental import pallas as pl
from jax.experimental.pallas import tpu as pltpu


LANE = 128


def _cdiv(a, b):
    return -(-a // b)


def _round_up(x, m):
    return ((x + m - 1) // m) * m


def _choose_tiling(r_total, *, tile_r_max, chunk_r, min_steps):
    """Pick rows-of-128-examples per grid step and the grid size."""
    target = _cdiv(r_total, min_steps)                       # aim for >= min_steps steps
    tile_r = max(chunk_r, min(tile_r_max, _round_up(target, chunk_r)))
    grid = _cdiv(r_total, tile_r)
    return tile_r, grid


# -----------------------------------------------------------------------------
# Kernel
#   params_ref : SMEM f32[sum(vocabs) + d_dense]   (concatenated dim-1 tables + w)
#   x_ref      : VMEM f32[n_cols, tile_r, 128]     batch on (sublane, lane); row f of
#                dim 0 is column f of X (ids for f < n_sparse, dense values after)
#   out_ref    : VMEM f32[tile_r, 128]             per-example logits (lane-dense)
# -----------------------------------------------------------------------------
def _make_linear_kernel(n_sparse, vocab_sizes, d_dense, tile_r, chunk_r):
    assert tile_r % chunk_r == 0
    n_chunks = tile_r // chunk_r
    total_vocab = sum(vocab_sizes)

    def kernel(params_ref, x_ref, out_ref):
        def body(c, carry):
            r0 = pl.multiple_of(c * chunk_r, chunk_r)
            # Two accumulator chains to shorten the dependent-add latency chain.
            acc0 = jnp.zeros((chunk_r, LANE), dtype=jnp.float32)
            acc1 = jnp.zeros((chunk_r, LANE), dtype=jnp.float32)

            # ---- sparse: dim-1 embedding gather via compare/select against the
            #      feature's own vocab only; table values read as SMEM scalars. ----
            base = 0
            for f in range(n_sparse):
                # truncation matches torch's .long() on integer-valued float ids
                ids = x_ref[f, pl.ds(r0, chunk_r), :].astype(jnp.int32)
                for vi in range(vocab_sizes[f]):
                    contrib = jnp.where(ids == vi, params_ref[base + vi], 0.0)
                    if f % 2 == 0:
                        acc0 = acc0 + contrib
                    else:
                        acc1 = acc1 + contrib
                base += vocab_sizes[f]

            # ---- dense: per-column multiply by a scalar weight from SMEM ----
            for j in range(d_dense):
                col = x_ref[n_sparse + j, pl.ds(r0, chunk_r), :]
                term = col * params_ref[total_vocab + j]
                if j % 2 == 0:
                    acc0 = acc0 + term
                else:
                    acc1 = acc1 + term

            out_ref[pl.ds(r0, chunk_r), :] = acc0 + acc1
            return carry

        lax.fori_loop(0, n_chunks, body, 0)

    return kernel


def linear_logit_pallas(params, x_t3, *, n_sparse, vocab_sizes, d_dense,
                        tile_r, chunk_r):
    """params: f32[sum(vocabs)+d_dense]; x_t3: f32[n_cols, r_pad, 128].
    Returns f32[r_pad, 128] logits (example b lives at (b // 128, b % 128))."""
    n_cols, r_pad, lane = x_t3.shape
    assert lane == LANE and r_pad % tile_r == 0
    grid = r_pad // tile_r
    total_vocab = sum(vocab_sizes)

    kernel = _make_linear_kernel(n_sparse, vocab_sizes, d_dense, tile_r, chunk_r)

    return pl.pallas_call(
        kernel,
        out_shape=jax.ShapeDtypeStruct((r_pad, LANE), jnp.float32),
        grid=(grid,),
        in_specs=[
            # tiny parameter vector, read as scalars -> SMEM (flat 1-D, no padding blowup)
            pl.BlockSpec(memory_space=pltpu.MemorySpace.SMEM),
            # batch tile of the transposed/reshaped X (contiguous lane-dense DMA)
            pl.BlockSpec((n_cols, tile_r, LANE), lambda i: (0, i, 0)),
        ],
        out_specs=pl.BlockSpec((tile_r, LANE), lambda i: (i, 0)),
        compiler_params=pltpu.CompilerParams(
            dimension_semantics=("parallel",)),
        cost_estimate=pl.CostEstimate(
            flops=r_pad * LANE * (3 * total_vocab + 2 * d_dense + n_sparse),
            transcendentals=0,
            bytes_accessed=r_pad * LANE * (n_cols + 1) * 4
                           + (total_vocab + d_dense) * 4),
    )(params, x_t3)


# -----------------------------------------------------------------------------
# Module wrapper (parameter setup + layout glue in plain JAX)
# -----------------------------------------------------------------------------
class LinearPallas:
    """Synthetic config:
         sparse feats : vocab sizes VOCABS, linear embedding dim = 1
         dense feats  : dims DENSE_DIMS
       X columns: [sparse ids ... | dense values ...]
    """

    VOCABS = (10, 20, 30)          # 3 sparse features
    DENSE_DIMS = (2, 3)            # 2 dense features, total dim 5
    INIT_STD = 0.0001
    TILE_R_MAX = 512               # 512*128 = 65536 examples / grid step (~2 MiB block)
    CHUNK_R = 32                   # register-resident sub-chunk: (32, 128) f32 = 4 vregs
    MIN_GRID_STEPS = 8             # let megacore (v7x) shard the batch axis

    def __init__(self, key):
        n_sparse = len(self.VOCABS)
        d_dense = sum(self.DENSE_DIMS)
        keys = jax.random.split(key, n_sparse + 1)
        # dim-1 linear embedding tables, init ~ N(0, init_std)
        self.emb_tables = [
            self.INIT_STD * jax.random.normal(keys[i], (v, 1), dtype=jnp.float32)
            for i, v in enumerate(self.VOCABS)
        ]
        # dense linear weight [sum(dense dims), 1], init ~ N(0, init_std)
        self.weight = self.INIT_STD * jax.random.normal(
            keys[-1], (d_dense, 1), dtype=jnp.float32)
        self.n_sparse = n_sparse
        self.d_dense = d_dense
        self.n_cols = n_sparse + d_dense

    def __call__(self, X):
        B = X.shape[0]
        assert X.shape[1] == self.n_cols
        r_total = _cdiv(B, LANE)
        tile_r, grid = _choose_tiling(
            r_total, tile_r_max=self.TILE_R_MAX, chunk_r=self.CHUNK_R,
            min_steps=self.MIN_GRID_STEPS)
        b_pad = grid * tile_r * LANE

        # One fused producer pass: transpose + tile-boundary zero-pad + free reshape.
        # Padded lanes carry id 0 / dense 0 -> they do produce tbl[0] logits, but they
        # are sliced off below before the result is used.
        x_t = jnp.transpose(X.astype(jnp.float32))            # (n_cols, B)
        if b_pad > B:
            x_t = jnp.pad(x_t, ((0, 0), (0, b_pad - B)))
        x_t3 = x_t.reshape(self.n_cols, b_pad // LANE, LANE)  # (n_cols, r_pad, 128)

        # All parameters flattened into one tiny SMEM-resident vector:
        # [tbl_0 | tbl_1 | tbl_2 | dense weight]
        params = jnp.concatenate(
            [t.reshape(-1) for t in self.emb_tables] + [self.weight.reshape(-1)]
        ).astype(jnp.float32)

        out = linear_logit_pallas(
            params, x_t3,
            n_sparse=self.n_sparse, vocab_sizes=self.VOCABS, d_dense=self.d_dense,
            tile_r=tile_r, chunk_r=self.CHUNK_R)               # (r_pad, 128)

        return out.reshape(-1)[:B].reshape(B, 1)               # [B, 1]

    # pure-JAX reference for validation
    def reference(self, X):
        sparse_cols = [jnp.take(tbl, X[:, i].astype(jnp.int32), axis=0)
                       for i, tbl in enumerate(self.emb_tables)]
        sparse_emb_cat = jnp.concatenate(sparse_cols, axis=-1)
        sparse_logit = jnp.sum(sparse_emb_cat, axis=-1, keepdims=True)
        dense_vals = X[:, self.n_sparse:self.n_sparse + self.d_dense]
        dense_logit = dense_vals @ self.weight
        return sparse_logit + dense_logit


if __name__ == "__main__":
    key = jax.random.PRNGKey(0)
    k_param, k_ids, k_dense = jax.random.split(key, 3)

    model = LinearPallas(k_param)

    B = 8
    # sparse id columns (ints stored as float, like DeepCTR's flat X)
    id_keys = jax.random.split(k_ids, model.n_sparse)
    id_cols = [
        jax.random.randint(id_keys[i], (B, 1), 0, v).astype(jnp.float32)
        for i, v in enumerate(model.VOCABS)
    ]
    dense_cols = jax.random.normal(k_dense, (B, model.d_dense), dtype=jnp.float32)
    X = jnp.concatenate(id_cols + [dense_cols], axis=-1)       # [B, 8]

    out = jax.block_until_ready(model(X))
    ref = model.reference(X)
    assert out.shape == (B, 1), out.shape
    assert jnp.allclose(out, ref, atol=1e-6, rtol=1e-5), (out, ref)

    print("KERNEL_OK")
</pallas_src>

<mosaic_0001>
module attributes {stable_mosaic.version = 11 : i64} {
  func.func @kernel(%arg0: i32, %arg1: memref<65xf32, #tpu.memory_space<smem>>, %arg2: memref<8x32x128xf32, #tpu.memory_space<vmem>>, %arg3: memref<32x128xf32, #tpu.memory_space<vmem>>) attributes {dimension_semantics = [#tpu.dimension_semantics<parallel>], iteration_bounds = array<i64: 1>, scalar_prefetch = 0 : i64, scratch_operands = 0 : i64, tpu.core_type = #tpu.core_type<tc>, window_params = [{transform_indices = @transform_0, window_bounds = array<i64: 65>}, {transform_indices = @transform_1, window_bounds = array<i64: 8, 32, 128>}, {transform_indices = @transform_2, window_bounds = array<i64: 32, 128>}]} {
    %c0_i32 = arith.constant 0 : i32
    %c32_i32 = arith.constant 32 : i32
    %0 = arith.muli %c0_i32, %c32_i32 : i32
    %1 = tpu.assume_multiple %0, 32 : i32
    %cst = arith.constant 0.000000e+00 : f32
    %2 = vector.broadcast %cst : f32 to vector<32x128xf32>
    %cst_0 = arith.constant 0.000000e+00 : f32
    %3 = vector.broadcast %cst_0 : f32 to vector<32x128xf32>
    %c0 = arith.constant 0 : index
    %4 = arith.index_cast %1 : i32 to index
    %c0_1 = arith.constant 0 : index
    %5 = vector.load %arg2[%c0, %4, %c0_1] : memref<8x32x128xf32, #tpu.memory_space<vmem>>, vector<1x32x128xf32>
    %6 = vector.shape_cast %5 : vector<1x32x128xf32> to vector<32x128xf32>
    %7 = arith.fptosi %6 : vector<32x128xf32> to vector<32x128xi32>
    %c0_i32_2 = arith.constant 0 : i32
    %8 = vector.broadcast %c0_i32_2 : i32 to vector<32x128xi32>
    %9 = arith.cmpi eq, %7, %8 : vector<32x128xi32>
    %c0_3 = arith.constant 0 : index
    %10 = memref.load %arg1[%c0_3] : memref<65xf32, #tpu.memory_space<smem>>
    %cst_4 = arith.constant 0.000000e+00 : f32
    %11 = vector.broadcast %10 : f32 to vector<32x128xf32>
    %12 = vector.broadcast %cst_4 : f32 to vector<32x128xf32>
    %13 = arith.select %9, %11, %12 : vector<32x128xi1>, vector<32x128xf32>
    %14 = arith.addf %2, %13 : vector<32x128xf32>
    %c1_i32 = arith.constant 1 : i32
    %15 = vector.broadcast %c1_i32 : i32 to vector<32x128xi32>
    %16 = arith.cmpi eq, %7, %15 : vector<32x128xi32>
    %c1 = arith.constant 1 : index
    %17 = memref.load %arg1[%c1] : memref<65xf32, #tpu.memory_space<smem>>
    %cst_5 = arith.constant 0.000000e+00 : f32
    %18 = vector.broadcast %17 : f32 to vector<32x128xf32>
    %19 = vector.broadcast %cst_5 : f32 to vector<32x128xf32>
    %20 = arith.select %16, %18, %19 : vector<32x128xi1>, vector<32x128xf32>
    %21 = arith.addf %14, %20 : vector<32x128xf32>
    %c2_i32 = arith.constant 2 : i32
    %22 = vector.broadcast %c2_i32 : i32 to vector<32x128xi32>
    %23 = arith.cmpi eq, %7, %22 : vector<32x128xi32>
    %c2 = arith.constant 2 : index
    %24 = memref.load %arg1[%c2] : memref<65xf32, #tpu.memory_space<smem>>
    %cst_6 = arith.constant 0.000000e+00 : f32
    %25 = vector.broadcast %24 : f32 to vector<32x128xf32>
    %26 = vector.broadcast %cst_6 : f32 to vector<32x128xf32>
    %27 = arith.select %23, %25, %26 : vector<32x128xi1>, vector<32x128xf32>
    %28 = arith.addf %21, %27 : vector<32x128xf32>
    %c3_i32 = arith.constant 3 : i32
    %29 = vector.broadcast %c3_i32 : i32 to vector<32x128xi32>
    %30 = arith.cmpi eq, %7, %29 : vector<32x128xi32>
    %c3 = arith.constant 3 : index
    %31 = memref.load %arg1[%c3] : memref<65xf32, #tpu.memory_space<smem>>
    %cst_7 = arith.constant 0.000000e+00 : f32
    %32 = vector.broadcast %31 : f32 to vector<32x128xf32>
    %33 = vector.broadcast %cst_7 : f32 to vector<32x128xf32>
    %34 = arith.select %30, %32, %33 : vector<32x128xi1>, vector<32x128xf32>
    %35 = arith.addf %28, %34 : vector<32x128xf32>
    %c4_i32 = arith.constant 4 : i32
    %36 = vector.broadcast %c4_i32 : i32 to vector<32x128xi32>
    %37 = arith.cmpi eq, %7, %36 : vector<32x128xi32>
    %c4 = arith.constant 4 : index
    %38 = memref.load %arg1[%c4] : memref<65xf32, #tpu.memory_space<smem>>
    %cst_8 = arith.constant 0.000000e+00 : f32
    %39 = vector.broadcast %38 : f32 to vector<32x128xf32>
    %40 = vector.broadcast %cst_8 : f32 to vector<32x128xf32>
    %41 = arith.select %37, %39, %40 : vector<32x128xi1>, vector<32x128xf32>
    %42 = arith.addf %35, %41 : vector<32x128xf32>
    %c5_i32 = arith.constant 5 : i32
    %43 = vector.broadcast %c5_i32 : i32 to vector<32x128xi32>
    %44 = arith.cmpi eq, %7, %43 : vector<32x128xi32>
    %c5 = arith.constant 5 : index
    %45 = memref.load %arg1[%c5] : memref<65xf32, #tpu.memory_space<smem>>
    %cst_9 = arith.constant 0.000000e+00 : f32
    %46 = vector.broadcast %45 : f32 to vector<32x128xf32>
    %47 = vector.broadcast %cst_9 : f32 to vector<32x128xf32>
    %48 = arith.select %44, %46, %47 : vector<32x128xi1>, vector<32x128xf32>
    %49 = arith.addf %42, %48 : vector<32x128xf32>
    %c6_i32 = arith.constant 6 : i32
    %50 = vector.broadcast %c6_i32 : i32 to vector<32x128xi32>
    %51 = arith.cmpi eq, %7, %50 : vector<32x128xi32>
    %c6 = arith.constant 6 : index
    %52 = memref.load %arg1[%c6] : memref<65xf32, #tpu.memory_space<smem>>
    %cst_10 = arith.constant 0.000000e+00 : f32
    %53 = vector.broadcast %52 : f32 to vector<32x128xf32>
    %54 = vector.broadcast %cst_10 : f32 to vector<32x128xf32>
    %55 = arith.select %51, %53, %54 : vector<32x128xi1>, vector<32x128xf32>
    %56 = arith.addf %49, %55 : vector<32x128xf32>
    %c7_i32 = arith.constant 7 : i32
    %57 = vector.broadcast %c7_i32 : i32 to vector<32x128xi32>
    %58 = arith.cmpi eq, %7, %57 : vector<32x128xi32>
    %c7 = arith.constant 7 : index
    %59 = memref.load %arg1[%c7] : memref<65xf32, #tpu.memory_space<smem>>
    %cst_11 = arith.constant 0.000000e+00 : f32
    %60 = vector.broadcast %59 : f32 to vector<32x128xf32>
    %61 = vector.broadcast %cst_11 : f32 to vector<32x128xf32>
    %62 = arith.select %58, %60, %61 : vector<32x128xi1>, vector<32x128xf32>
    %63 = arith.addf %56, %62 : vector<32x128xf32>
    %c8_i32 = arith.constant 8 : i32
    %64 = vector.broadcast %c8_i32 : i32 to vector<32x128xi32>
    %65 = arith.cmpi eq, %7, %64 : vector<32x128xi32>
    %c8 = arith.constant 8 : index
    %66 = memref.load %arg1[%c8] : memref<65xf32, #tpu.memory_space<smem>>
    %cst_12 = arith.constant 0.000000e+00 : f32
    %67 = vector.broadcast %66 : f32 to vector<32x128xf32>
    %68 = vector.broadcast %cst_12 : f32 to vector<32x128xf32>
    %69 = arith.select %65, %67, %68 : vector<32x128xi1>, vector<32x128xf32>
    %70 = arith.addf %63, %69 : vector<32x128xf32>
    %c9_i32 = arith.constant 9 : i32
    %71 = vector.broadcast %c9_i32 : i32 to vector<32x128xi32>
    %72 = arith.cmpi eq, %7, %71 : vector<32x128xi32>
    %c9 = arith.constant 9 : index
    %73 = memref.load %arg1[%c9] : memref<65xf32, #tpu.memory_space<smem>>
    %cst_13 = arith.constant 0.000000e+00 : f32
    %74 = vector.broadcast %73 : f32 to vector<32x128xf32>
    %75 = vector.broadcast %cst_13 : f32 to vector<32x128xf32>
    %76 = arith.select %72, %74, %75 : vector<32x128xi1>, vector<32x128xf32>
    %77 = arith.addf %70, %76 : vector<32x128xf32>
    %c1_14 = arith.constant 1 : index
    %78 = arith.index_cast %1 : i32 to index
    %c0_15 = arith.constant 0 : index
    %79 = vector.load %arg2[%c1_14, %78, %c0_15] : memref<8x32x128xf32, #tpu.memory_space<vmem>>, vector<1x32x128xf32>
    %80 = vector.shape_cast %79 : vector<1x32x128xf32> to vector<32x128xf32>
    %81 = arith.fptosi %80 : vector<32x128xf32> to vector<32x128xi32>
    %c0_i32_16 = arith.constant 0 : i32
    %82 = vector.broadcast %c0_i32_16 : i32 to vector<32x128xi32>
    %83 = arith.cmpi eq, %81, %82 : vector<32x128xi32>
    %c10 = arith.constant 10 : index
    %84 = memref.load %arg1[%c10] : memref<65xf32, #tpu.memory_space<smem>>
    %cst_17 = arith.constant 0.000000e+00 : f32
    %85 = vector.broadcast %84 : f32 to vector<32x128xf32>
    %86 = vector.broadcast %cst_17 : f32 to vector<32x128xf32>
    %87 = arith.select %83, %85, %86 : vector<32x128xi1>, vector<32x128xf32>
    %88 = arith.addf %3, %87 : vector<32x128xf32>
    %c1_i32_18 = arith.constant 1 : i32
    %89 = vector.broadcast %c1_i32_18 : i32 to vector<32x128xi32>
    %90 = arith.cmpi eq, %81, %89 : vector<32x128xi32>
    %c11 = arith.constant 11 : index
    %91 = memref.load %arg1[%c11] : memref<65xf32, #tpu.memory_space<smem>>
    %cst_19 = arith.constant 0.000000e+00 : f32
    %92 = vector.broadcast %91 : f32 to vector<32x128xf32>
    %93 = vector.broadcast %cst_19 : f32 to vector<32x128xf32>
    %94 = arith.select %90, %92, %93 : vector<32x128xi1>, vector<32x128xf32>
    %95 = arith.addf %88, %94 : vector<32x128xf32>
    %c2_i32_20 = arith.constant 2 : i32
    %96 = vector.broadcast %c2_i32_20 : i32 to vector<32x128xi32>
    %97 = arith.cmpi eq, %81, %96 : vector<32x128xi32>
    %c12 = arith.constant 12 : index
    %98 = memref.load %arg1[%c12] : memref<65xf32, #tpu.memory_space<smem>>
    %cst_21 = arith.constant 0.000000e+00 : f32
    %99 = vector.broadcast %98 : f32 to vector<32x128xf32>
    %100 = vector.broadcast %cst_21 : f32 to vector<32x128xf32>
    %101 = arith.select %97, %99, %100 : vector<32x128xi1>, vector<32x128xf32>
    %102 = arith.addf %95, %101 : vector<32x128xf32>
    %c3_i32_22 = arith.constant 3 : i32
    %103 = vector.broadcast %c3_i32_22 : i32 to vector<32x128xi32>
    %104 = arith.cmpi eq, %81, %103 : vector<32x128xi32>
    %c13 = arith.constant 13 : index
    %105 = memref.load %arg1[%c13] : memref<65xf32, #tpu.memory_space<smem>>
    %cst_23 = arith.constant 0.000000e+00 : f32
    %106 = vector.broadcast %105 : f32 to vector<32x128xf32>
    %107 = vector.broadcast %cst_23 : f32 to vector<32x128xf32>
    %108 = arith.select %104, %106, %107 : vector<32x128xi1>, vector<32x128xf32>
    %109 = arith.addf %102, %108 : vector<32x128xf32>
    %c4_i32_24 = arith.constant 4 : i32
    %110 = vector.broadcast %c4_i32_24 : i32 to vector<32x128xi32>
    %111 = arith.cmpi eq, %81, %110 : vector<32x128xi32>
    %c14 = arith.constant 14 : index
    %112 = memref.load %arg1[%c14] : memref<65xf32, #tpu.memory_space<smem>>
    %cst_25 = arith.constant 0.000000e+00 : f32
    %113 = vector.broadcast %112 : f32 to vector<32x128xf32>
    %114 = vector.broadcast %cst_25 : f32 to vector<32x128xf32>
    %115 = arith.select %111, %113, %114 : vector<32x128xi1>, vector<32x128xf32>
    %116 = arith.addf %109, %115 : vector<32x128xf32>
    %c5_i32_26 = arith.constant 5 : i32
    %117 = vector.broadcast %c5_i32_26 : i32 to vector<32x128xi32>
    %118 = arith.cmpi eq, %81, %117 : vector<32x128xi32>
    %c15 = arith.constant 15 : index
    %119 = memref.load %arg1[%c15] : memref<65xf32, #tpu.memory_space<smem>>
    %cst_27 = arith.constant 0.000000e+00 : f32
    %120 = vector.broadcast %119 : f32 to vector<32x128xf32>
    %121 = vector.broadcast %cst_27 : f32 to vector<32x128xf32>
    %122 = arith.select %118, %120, %121 : vector<32x128xi1>, vector<32x128xf32>
    %123 = arith.addf %116, %122 : vector<32x128xf32>
    %c6_i32_28 = arith.constant 6 : i32
    %124 = vector.broadcast %c6_i32_28 : i32 to vector<32x128xi32>
    %125 = arith.cmpi eq, %81, %124 : vector<32x128xi32>
    %c16 = arith.constant 16 : index
    %126 = memref.load %arg1[%c16] : memref<65xf32, #tpu.memory_space<smem>>
    %cst_29 = arith.constant 0.000000e+00 : f32
    %127 = vector.broadcast %126 : f32 to vector<32x128xf32>
    %128 = vector.broadcast %cst_29 : f32 to vector<32x128xf32>
    %129 = arith.select %125, %127, %128 : vector<32x128xi1>, vector<32x128xf32>
    %130 = arith.addf %123, %129 : vector<32x128xf32>
    %c7_i32_30 = arith.constant 7 : i32
    %131 = vector.broadcast %c7_i32_30 : i32 to vector<32x128xi32>
    %132 = arith.cmpi eq, %81, %131 : vector<32x128xi32>
    %c17 = arith.constant 17 : index
    %133 = memref.load %arg1[%c17] : memref<65xf32, #tpu.memory_space<smem>>
    %cst_31 = arith.constant 0.000000e+00 : f32
    %134 = vector.broadcast %133 : f32 to vector<32x128xf32>
    %135 = vector.broadcast %cst_31 : f32 to vector<32x128xf32>
    %136 = arith.select %132, %134, %135 : vector<32x128xi1>, vector<32x128xf32>
    %137 = arith.addf %130, %136 : vector<32x128xf32>
    %c8_i32_32 = arith.constant 8 : i32
    %138 = vector.broadcast %c8_i32_32 : i32 to vector<32x128xi32>
    %139 = arith.cmpi eq, %81, %138 : vector<32x128xi32>
    %c18 = arith.constant 18 : index
    %140 = memref.load %arg1[%c18] : memref<65xf32, #tpu.memory_space<smem>>
    %cst_33 = arith.constant 0.000000e+00 : f32
    %141 = vector.broadcast %140 : f32 to vector<32x128xf32>
    %142 = vector.broadcast %cst_33 : f32 to vector<32x128xf32>
    %143 = arith.select %139, %141, %142 : vector<32x128xi1>, vector<32x128xf32>
    %144 = arith.addf %137, %143 : vector<32x128xf32>
    %c9_i32_34 = arith.constant 9 : i32
    %145 = vector.broadcast %c9_i32_34 : i32 to vector<32x128xi32>
    %146 = arith.cmpi eq, %81, %145 : vector<32x128xi32>
    %c19 = arith.constant 19 : index
    %147 = memref.load %arg1[%c19] : memref<65xf32, #tpu.memory_space<smem>>
    %cst_35 = arith.constant 0.000000e+00 : f32
    %148 = vector.broadcast %147 : f32 to vector<32x128xf32>
    %149 = vector.broadcast %cst_35 : f32 to vector<32x128xf32>
    %150 = arith.select %146, %148, %149 : vector<32x128xi1>, vector<32x128xf32>
    %151 = arith.addf %144, %150 : vector<32x128xf32>
    %c10_i32 = arith.constant 10 : i32
    %152 = vector.broadcast %c10_i32 : i32 to vector<32x128xi32>
    %153 = arith.cmpi eq, %81, %152 : vector<32x128xi32>
    %c20 = arith.constant 20 : index
    %154 = memref.load %arg1[%c20] : memref<65xf32, #tpu.memory_space<smem>>
    %cst_36 = arith.constant 0.000000e+00 : f32
    %155 = vector.broadcast %154 : f32 to vector<32x128xf32>
    %156 = vector.broadcast %cst_36 : f32 to vector<32x128xf32>
    %157 = arith.select %153, %155, %156 : vector<32x128xi1>, vector<32x128xf32>
    %158 = arith.addf %151, %157 : vector<32x128xf32>
    %c11_i32 = arith.constant 11 : i32
    %159 = vector.broadcast %c11_i32 : i32 to vector<32x128xi32>
    %160 = arith.cmpi eq, %81, %159 : vector<32x128xi32>
    %c21 = arith.constant 21 : index
    %161 = memref.load %arg1[%c21] : memref<65xf32, #tpu.memory_space<smem>>
    %cst_37 = arith.constant 0.000000e+00 : f32
    %162 = vector.broadcast %161 : f32 to vector<32x128xf32>
    %163 = vector.broadcast %cst_37 : f32 to vector<32x128xf32>
    %164 = arith.select %160, %162, %163 : vector<32x128xi1>, vector<32x128xf32>
    %165 = arith.addf %158, %164 : vector<32x128xf32>
    %c12_i32 = arith.constant 12 : i32
    %166 = vector.broadcast %c12_i32 : i32 to vector<32x128xi32>
    %167 = arith.cmpi eq, %81, %166 : vector<32x128xi32>
    %c22 = arith.constant 22 : index
    %168 = memref.load %arg1[%c22] : memref<65xf32, #tpu.memory_space<smem>>
    %cst_38 = arith.constant 0.000000e+00 : f32
    %169 = vector.broadcast %168 : f32 to vector<32x128xf32>
    %170 = vector.broadcast %cst_38 : f32 to vector<32x128xf32>
    %171 = arith.select %167, %169, %170 : vector<32x128xi1>, vector<32x128xf32>
    %172 = arith.addf %165, %171 : vector<32x128xf32>
    %c13_i32 = arith.constant 13 : i32
    %173 = vector.broadcast %c13_i32 : i32 to vector<32x128xi32>
    %174 = arith.cmpi eq, %81, %173 : vector<32x128xi32>
    %c23 = arith.constant 23 : index
    %175 = memref.load %arg1[%c23] : memref<65xf32, #tpu.memory_space<smem>>
    %cst_39 = arith.constant 0.000000e+00 : f32
    %176 = vector.broadcast %175 : f32 to vector<32x128xf32>
    %177 = vector.broadcast %cst_39 : f32 to vector<32x128xf32>
    %178 = arith.select %174, %176, %177 : vector<32x128xi1>, vector<32x128xf32>
    %179 = arith.addf %172, %178 : vector<32x128xf32>
    %c14_i32 = arith.constant 14 : i32
    %180 = vector.broadcast %c14_i32 : i32 to vector<32x128xi32>
    %181 = arith.cmpi eq, %81, %180 : vector<32x128xi32>
    %c24 = arith.constant 24 : index
    %182 = memref.load %arg1[%c24] : memref<65xf32, #tpu.memory_space<smem>>
    %cst_40 = arith.constant 0.000000e+00 : f32
    %183 = vector.broadcast %182 : f32 to vector<32x128xf32>
    %184 = vector.broadcast %cst_40 : f32 to vector<32x128xf32>
    %185 = arith.select %181, %183, %184 : vector<32x128xi1>, vector<32x128xf32>
    %186 = arith.addf %179, %185 : vector<32x128xf32>
    %c15_i32 = arith.constant 15 : i32
    %187 = vector.broadcast %c15_i32 : i32 to vector<32x128xi32>
    %188 = arith.cmpi eq, %81, %187 : vector<32x128xi32>
    %c25 = arith.constant 25 : index
    %189 = memref.load %arg1[%c25] : memref<65xf32, #tpu.memory_space<smem>>
    %cst_41 = arith.constant 0.000000e+00 : f32
    %190 = vector.broadcast %189 : f32 to vector<32x128xf32>
    %191 = vector.broadcast %cst_41 : f32 to vector<32x128xf32>
    %192 = arith.select %188, %190, %191 : vector<32x128xi1>, vector<32x128xf32>
    %193 = arith.addf %186, %192 : vector<32x128xf32>
    %c16_i32 = arith.constant 16 : i32
    %194 = vector.broadcast %c16_i32 : i32 to vector<32x128xi32>
    %195 = arith.cmpi eq, %81, %194 : vector<32x128xi32>
    %c26 = arith.constant 26 : index
    %196 = memref.load %arg1[%c26] : memref<65xf32, #tpu.memory_space<smem>>
    %cst_42 = arith.constant 0.000000e+00 : f32
    %197 = vector.broadcast %196 : f32 to vector<32x128xf32>
    %198 = vector.broadcast %cst_42 : f32 to vector<32x128xf32>
    %199 = arith.select %195, %197, %198 : vector<32x128xi1>, vector<32x128xf32>
    %200 = arith.addf %193, %199 : vector<32x128xf32>
    %c17_i32 = arith.constant 17 : i32
    %201 = vector.broadcast %c17_i32 : i32 to vector<32x128xi32>
    %202 = arith.cmpi eq, %81, %201 : vector<32x128xi32>
    %c27 = arith.constant 27 : index
    %203 = memref.load %arg1[%c27] : memref<65xf32, #tpu.memory_space<smem>>
    %cst_43 = arith.constant 0.000000e+00 : f32
    %204 = vector.broadcast %203 : f32 to vector<32x128xf32>
    %205 = vector.broadcast %cst_43 : f32 to vector<32x128xf32>
    %206 = arith.select %202, %204, %205 : vector<32x128xi1>, vector<32x128xf32>
    %207 = arith.addf %200, %206 : vector<32x128xf32>
    %c18_i32 = arith.constant 18 : i32
    %208 = vector.broadcast %c18_i32 : i32 to vector<32x128xi32>
    %209 = arith.cmpi eq, %81, %208 : vector<32x128xi32>
    %c28 = arith.constant 28 : index
    %210 = memref.load %arg1[%c28] : memref<65xf32, #tpu.memory_space<smem>>
    %cst_44 = arith.constant 0.000000e+00 : f32
    %211 = vector.broadcast %210 : f32 to vector<32x128xf32>
    %212 = vector.broadcast %cst_44 : f32 to vector<32x128xf32>
    %213 = arith.select %209, %211, %212 : vector<32x128xi1>, vector<32x128xf32>
    %214 = arith.addf %207, %213 : vector<32x128xf32>
    %c19_i32 = arith.constant 19 : i32
    %215 = vector.broadcast %c19_i32 : i32 to vector<32x128xi32>
    %216 = arith.cmpi eq, %81, %215 : vector<32x128xi32>
    %c29 = arith.constant 29 : index
    %217 = memref.load %arg1[%c29] : memref<65xf32, #tpu.memory_space<smem>>
    %cst_45 = arith.constant 0.000000e+00 : f32
    %218 = vector.broadcast %217 : f32 to vector<32x128xf32>
    %219 = vector.broadcast %cst_45 : f32 to vector<32x128xf32>
    %220 = arith.select %216, %218, %219 : vector<32x128xi1>, vector<32x128xf32>
    %221 = arith.addf %214, %220 : vector<32x128xf32>
    %c2_46 = arith.constant 2 : index
    %222 = arith.index_cast %1 : i32 to index
    %c0_47 = arith.constant 0 : index
    %223 = vector.load %arg2[%c2_46, %222, %c0_47] : memref<8x32x128xf32, #tpu.memory_space<vmem>>, vector<1x32x128xf32>
    %224 = vector.shape_cast %223 : vector<1x32x128xf32> to vector<32x128xf32>
    %225 = arith.fptosi %224 : vector<32x128xf32> to vector<32x128xi32>
    %c0_i32_48 = arith.constant 0 : i32
    %226 = vector.broadcast %c0_i32_48 : i32 to vector<32x128xi32>
    %227 = arith.cmpi eq, %225, %226 : vector<32x128xi32>
    %c30 = arith.constant 30 : index
    %228 = memref.load %arg1[%c30] : memref<65xf32, #tpu.memory_space<smem>>
    %cst_49 = arith.constant 0.000000e+00 : f32
    %229 = vector.broadcast %228 : f32 to vector<32x128xf32>
    %230 = vector.broadcast %cst_49 : f32 to vector<32x128xf32>
    %231 = arith.select %227, %229, %230 : vector<32x128xi1>, vector<32x128xf32>
    %232 = arith.addf %77, %231 : vector<32x128xf32>
    %c1_i32_50 = arith.constant 1 : i32
    %233 = vector.broadcast %c1_i32_50 : i32 to vector<32x128xi32>
    %234 = arith.cmpi eq, %225, %233 : vector<32x128xi32>
    %c31 = arith.constant 31 : index
    %235 = memref.load %arg1[%c31] : memref<65xf32, #tpu.memory_space<smem>>
    %cst_51 = arith.constant 0.000000e+00 : f32
    %236 = vector.broadcast %235 : f32 to vector<32x128xf32>
    %237 = vector.broadcast %cst_51 : f32 to vector<32x128xf32>
    %238 = arith.select %234, %236, %237 : vector<32x128xi1>, vector<32x128xf32>
    %239 = arith.addf %232, %238 : vector<32x128xf32>
    %c2_i32_52 = arith.constant 2 : i32
    %240 = vector.broadcast %c2_i32_52 : i32 to vector<32x128xi32>
    %241 = arith.cmpi eq, %225, %240 : vector<32x128xi32>
    %c32 = arith.constant 32 : index
    %242 = memref.load %arg1[%c32] : memref<65xf32, #tpu.memory_space<smem>>
    %cst_53 = arith.constant 0.000000e+00 : f32
    %243 = vector.broadcast %242 : f32 to vector<32x128xf32>
    %244 = vector.broadcast %cst_53 : f32 to vector<32x128xf32>
    %245 = arith.select %241, %243, %244 : vector<32x128xi1>, vector<32x128xf32>
    %246 = arith.addf %239, %245 : vector<32x128xf32>
    %c3_i32_54 = arith.constant 3 : i32
    %247 = vector.broadcast %c3_i32_54 : i32 to vector<32x128xi32>
    %248 = arith.cmpi eq, %225, %247 : vector<32x128xi32>
    %c33 = arith.constant 33 : index
    %249 = memref.load %arg1[%c33] : memref<65xf32, #tpu.memory_space<smem>>
    %cst_55 = arith.constant 0.000000e+00 : f32
    %250 = vector.broadcast %249 : f32 to vector<32x128xf32>
    %251 = vector.broadcast %cst_55 : f32 to vector<32x128xf32>
    %252 = arith.select %248, %250, %251 : vector<32x128xi1>, vector<32x128xf32>
    %253 = arith.addf %246, %252 : vector<32x128xf32>
    %c4_i32_56 = arith.constant 4 : i32
    %254 = vector.broadcast %c4_i32_56 : i32 to vector<32x128xi32>
    %255 = arith.cmpi eq, %225, %254 : vector<32x128xi32>
    %c34 = arith.constant 34 : index
    %256 = memref.load %arg1[%c34] : memref<65xf32, #tpu.memory_space<smem>>
    %cst_57 = arith.constant 0.000000e+00 : f32
    %257 = vector.broadcast %256 : f32 to vector<32x128xf32>
    %258 = vector.broadcast %cst_57 : f32 to vector<32x128xf32>
    %259 = arith.select %255, %257, %258 : vector<32x128xi1>, vector<32x128xf32>
    %260 = arith.addf %253, %259 : vector<32x128xf32>
    %c5_i32_58 = arith.constant 5 : i32
    %261 = vector.broadcast %c5_i32_58 : i32 to vector<32x128xi32>
    %262 = arith.cmpi eq, %225, %261 : vector<32x128xi32>
    %c35 = arith.constant 35 : index
    %263 = memref.load %arg1[%c35] : memref<65xf32, #tpu.memory_space<smem>>
    %cst_59 = arith.constant 0.000000e+00 : f32
    %264 = vector.broadcast %263 : f32 to vector<32x128xf32>
    %265 = vector.broadcast %cst_59 : f32 to vector<32x128xf32>
    %266 = arith.select %262, %264, %265 : vector<32x128xi1>, vector<32x128xf32>
    %267 = arith.addf %260, %266 : vector<32x128xf32>
    %c6_i32_60 = arith.constant 6 : i32
    %268 = vector.broadcast %c6_i32_60 : i32 to vector<32x128xi32>
    %269 = arith.cmpi eq, %225, %268 : vector<32x128xi32>
    %c36 = arith.constant 36 : index
    %270 = memref.load %arg1[%c36] : memref<65xf32, #tpu.memory_space<smem>>
    %cst_61 = arith.constant 0.000000e+00 : f32
    %271 = vector.broadcast %270 : f32 to vector<32x128xf32>
    %272 = vector.broadcast %cst_61 : f32 to vector<32x128xf32>
    %273 = arith.select %269, %271, %272 : vector<32x128xi1>, vector<32x128xf32>
    %274 = arith.addf %267, %273 : vector<32x128xf32>
    %c7_i32_62 = arith.constant 7 : i32
    %275 = vector.broadcast %c7_i32_62 : i32 to vector<32x128xi32>
    %276 = arith.cmpi eq, %225, %275 : vector<32x128xi32>
    %c37 = arith.constant 37 : index
    %277 = memref.load %arg1[%c37] : memref<65xf32, #tpu.memory_space<smem>>
    %cst_63 = arith.constant 0.000000e+00 : f32
    %278 = vector.broadcast %277 : f32 to vector<32x128xf32>
    %279 = vector.broadcast %cst_63 : f32 to vector<32x128xf32>
    %280 = arith.select %276, %278, %279 : vector<32x128xi1>, vector<32x128xf32>
    %281 = arith.addf %274, %280 : vector<32x128xf32>
    %c8_i32_64 = arith.constant 8 : i32
    %282 = vector.broadcast %c8_i32_64 : i32 to vector<32x128xi32>
    %283 = arith.cmpi eq, %225, %282 : vector<32x128xi32>
    %c38 = arith.constant 38 : index
    %284 = memref.load %arg1[%c38] : memref<65xf32, #tpu.memory_space<smem>>
    %cst_65 = arith.constant 0.000000e+00 : f32
    %285 = vector.broadcast %284 : f32 to vector<32x128xf32>
    %286 = vector.broadcast %cst_65 : f32 to vector<32x128xf32>
    %287 = arith.select %283, %285, %286 : vector<32x128xi1>, vector<32x128xf32>
    %288 = arith.addf %281, %287 : vector<32x128xf32>
    %c9_i32_66 = arith.constant 9 : i32
    %289 = vector.broadcast %c9_i32_66 : i32 to vector<32x128xi32>
    %290 = arith.cmpi eq, %225, %289 : vector<32x128xi32>
    %c39 = arith.constant 39 : index
    %291 = memref.load %arg1[%c39] : memref<65xf32, #tpu.memory_space<smem>>
    %cst_67 = arith.constant 0.000000e+00 : f32
    %292 = vector.broadcast %291 : f32 to vector<32x128xf32>
    %293 = vector.broadcast %cst_67 : f32 to vector<32x128xf32>
    %294 = arith.select %290, %292, %293 : vector<32x128xi1>, vector<32x128xf32>
    %295 = arith.addf %288, %294 : vector<32x128xf32>
    %c10_i32_68 = arith.constant 10 : i32
    %296 = vector.broadcast %c10_i32_68 : i32 to vector<32x128xi32>
    %297 = arith.cmpi eq, %225, %296 : vector<32x128xi32>
    %c40 = arith.constant 40 : index
    %298 = memref.load %arg1[%c40] : memref<65xf32, #tpu.memory_space<smem>>
    %cst_69 = arith.constant 0.000000e+00 : f32
    %299 = vector.broadcast %298 : f32 to vector<32x128xf32>
    %300 = vector.broadcast %cst_69 : f32 to vector<32x128xf32>
    %301 = arith.select %297, %299, %300 : vector<32x128xi1>, vector<32x128xf32>
    %302 = arith.addf %295, %301 : vector<32x128xf32>
    %c11_i32_70 = arith.constant 11 : i32
    %303 = vector.broadcast %c11_i32_70 : i32 to vector<32x128xi32>
    %304 = arith.cmpi eq, %225, %303 : vector<32x128xi32>
    %c41 = arith.constant 41 : index
    %305 = memref.load %arg1[%c41] : memref<65xf32, #tpu.memory_space<smem>>
    %cst_71 = arith.constant 0.000000e+00 : f32
    %306 = vector.broadcast %305 : f32 to vector<32x128xf32>
    %307 = vector.broadcast %cst_71 : f32 to vector<32x128xf32>
    %308 = arith.select %304, %306, %307 : vector<32x128xi1>, vector<32x128xf32>
    %309 = arith.addf %302, %308 : vector<32x128xf32>
    %c12_i32_72 = arith.constant 12 : i32
    %310 = vector.broadcast %c12_i32_72 : i32 to vector<32x128xi32>
    %311 = arith.cmpi eq, %225, %310 : vector<32x128xi32>
    %c42 = arith.constant 42 : index
    %312 = memref.load %arg1[%c42] : memref<65xf32, #tpu.memory_space<smem>>
    %cst_73 = arith.constant 0.000000e+00 : f32
    %313 = vector.broadcast %312 : f32 to vector<32x128xf32>
    %314 = vector.broadcast %cst_73 : f32 to vector<32x128xf32>
    %315 = arith.select %311, %313, %314 : vector<32x128xi1>, vector<32x128xf32>
    %316 = arith.addf %309, %315 : vector<32x128xf32>
    %c13_i32_74 = arith.constant 13 : i32
    %317 = vector.broadcast %c13_i32_74 : i32 to vector<32x128xi32>
    %318 = arith.cmpi eq, %225, %317 : vector<32x128xi32>
    %c43 = arith.constant 43 : index
    %319 = memref.load %arg1[%c43] : memref<65xf32, #tpu.memory_space<smem>>
    %cst_75 = arith.constant 0.000000e+00 : f32
    %320 = vector.broadcast %319 : f32 to vector<32x128xf32>
    %321 = vector.broadcast %cst_75 : f32 to vector<32x128xf32>
    %322 = arith.select %318, %320, %321 : vector<32x128xi1>, vector<32x128xf32>
    %323 = arith.addf %316, %322 : vector<32x128xf32>
    %c14_i32_76 = arith.constant 14 : i32
    %324 = vector.broadcast %c14_i32_76 : i32 to vector<32x128xi32>
    %325 = arith.cmpi eq, %225, %324 : vector<32x128xi32>
    %c44 = arith.constant 44 : index
    %326 = memref.load %arg1[%c44] : memref<65xf32, #tpu.memory_space<smem>>
    %cst_77 = arith.constant 0.000000e+00 : f32
    %327 = vector.broadcast %326 : f32 to vector<32x128xf32>
    %328 = vector.broadcast %cst_77 : f32 to vector<32x128xf32>
    %329 = arith.select %325, %327, %328 : vector<32x128xi1>, vector<32x128xf32>
    %330 = arith.addf %323, %329 : vector<32x128xf32>
    %c15_i32_78 = arith.constant 15 : i32
    %331 = vector.broadcast %c15_i32_78 : i32 to vector<32x128xi32>
    %332 = arith.cmpi eq, %225, %331 : vector<32x128xi32>
    %c45 = arith.constant 45 : index
    %333 = memref.load %arg1[%c45] : memref<65xf32, #tpu.memory_space<smem>>
    %cst_79 = arith.constant 0.000000e+00 : f32
    %334 = vector.broadcast %333 : f32 to vector<32x128xf32>
    %335 = vector.broadcast %cst_79 : f32 to vector<32x128xf32>
    %336 = arith.select %332, %334, %335 : vector<32x128xi1>, vector<32x128xf32>
    %337 = arith.addf %330, %336 : vector<32x128xf32>
    %c16_i32_80 = arith.constant 16 : i32
    %338 = vector.broadcast %c16_i32_80 : i32 to vector<32x128xi32>
    %339 = arith.cmpi eq, %225, %338 : vector<32x128xi32>
    %c46 = arith.constant 46 : index
    %340 = memref.load %arg1[%c46] : memref<65xf32, #tpu.memory_space<smem>>
    %cst_81 = arith.constant 0.000000e+00 : f32
    %341 = vector.broadcast %340 : f32 to vector<32x128xf32>
    %342 = vector.broadcast %cst_81 : f32 to vector<32x128xf32>
    %343 = arith.select %339, %341, %342 : vector<32x128xi1>, vector<32x128xf32>
    %344 = arith.addf %337, %343 : vector<32x128xf32>
    %c17_i32_82 = arith.constant 17 : i32
    %345 = vector.broadcast %c17_i32_82 : i32 to vector<32x128xi32>
    %346 = arith.cmpi eq, %225, %345 : vector<32x128xi32>
    %c47 = arith.constant 47 : index
    %347 = memref.load %arg1[%c47] : memref<65xf32, #tpu.memory_space<smem>>
    %cst_83 = arith.constant 0.000000e+00 : f32
    %348 = vector.broadcast %347 : f32 to vector<32x128xf32>
    %349 = vector.broadcast %cst_83 : f32 to vector<32x128xf32>
    %350 = arith.select %346, %348, %349 : vector<32x128xi1>, vector<32x128xf32>
    %351 = arith.addf %344, %350 : vector<32x128xf32>
    %c18_i32_84 = arith.constant 18 : i32
    %352 = vector.broadcast %c18_i32_84 : i32 to vector<32x128xi32>
    %353 = arith.cmpi eq, %225, %352 : vector<32x128xi32>
    %c48 = arith.constant 48 : index
    %354 = memref.load %arg1[%c48] : memref<65xf32, #tpu.memory_space<smem>>
    %cst_85 = arith.constant 0.000000e+00 : f32
    %355 = vector.broadcast %354 : f32 to vector<32x128xf32>
    %356 = vector.broadcast %cst_85 : f32 to vector<32x128xf32>
    %357 = arith.select %353, %355, %356 : vector<32x128xi1>, vector<32x128xf32>
    %358 = arith.addf %351, %357 : vector<32x128xf32>
    %c19_i32_86 = arith.constant 19 : i32
    %359 = vector.broadcast %c19_i32_86 : i32 to vector<32x128xi32>
    %360 = arith.cmpi eq, %225, %359 : vector<32x128xi32>
    %c49 = arith.constant 49 : index
    %361 = memref.load %arg1[%c49] : memref<65xf32, #tpu.memory_space<smem>>
    %cst_87 = arith.constant 0.000000e+00 : f32
    %362 = vector.broadcast %361 : f32 to vector<32x128xf32>
    %363 = vector.broadcast %cst_87 : f32 to vector<32x128xf32>
    %364 = arith.select %360, %362, %363 : vector<32x128xi1>, vector<32x128xf32>
    %365 = arith.addf %358, %364 : vector<32x128xf32>
    %c20_i32 = arith.constant 20 : i32
    %366 = vector.broadcast %c20_i32 : i32 to vector<32x128xi32>
    %367 = arith.cmpi eq, %225, %366 : vector<32x128xi32>
    %c50 = arith.constant 50 : index
    %368 = memref.load %arg1[%c50] : memref<65xf32, #tpu.memory_space<smem>>
    %cst_88 = arith.constant 0.000000e+00 : f32
    %369 = vector.broadcast %368 : f32 to vector<32x128xf32>
    %370 = vector.broadcast %cst_88 : f32 to vector<32x128xf32>
    %371 = arith.select %367, %369, %370 : vector<32x128xi1>, vector<32x128xf32>
    %372 = arith.addf %365, %371 : vector<32x128xf32>
    %c21_i32 = arith.constant 21 : i32
    %373 = vector.broadcast %c21_i32 : i32 to vector<32x128xi32>
    %374 = arith.cmpi eq, %225, %373 : vector<32x128xi32>
    %c51 = arith.constant 51 : index
    %375 = memref.load %arg1[%c51] : memref<65xf32, #tpu.memory_space<smem>>
    %cst_89 = arith.constant 0.000000e+00 : f32
    %376 = vector.broadcast %375 : f32 to vector<32x128xf32>
    %377 = vector.broadcast %cst_89 : f32 to vector<32x128xf32>
    %378 = arith.select %374, %376, %377 : vector<32x128xi1>, vector<32x128xf32>
    %379 = arith.addf %372, %378 : vector<32x128xf32>
    %c22_i32 = arith.constant 22 : i32
    %380 = vector.broadcast %c22_i32 : i32 to vector<32x128xi32>
    %381 = arith.cmpi eq, %225, %380 : vector<32x128xi32>
    %c52 = arith.constant 52 : index
    %382 = memref.load %arg1[%c52] : memref<65xf32, #tpu.memory_space<smem>>
    %cst_90 = arith.constant 0.000000e+00 : f32
    %383 = vector.broadcast %382 : f32 to vector<32x128xf32>
    %384 = vector.broadcast %cst_90 : f32 to vector<32x128xf32>
    %385 = arith.select %381, %383, %384 : vector<32x128xi1>, vector<32x128xf32>
    %386 = arith.addf %379, %385 : vector<32x128xf32>
    %c23_i32 = arith.constant 23 : i32
    %387 = vector.broadcast %c23_i32 : i32 to vector<32x128xi32>
    %388 = arith.cmpi eq, %225, %387 : vector<32x128xi32>
    %c53 = arith.constant 53 : index
    %389 = memref.load %arg1[%c53] : memref<65xf32, #tpu.memory_space<smem>>
    %cst_91 = arith.constant 0.000000e+00 : f32
    %390 = vector.broadcast %389 : f32 to vector<32x128xf32>
    %391 = vector.broadcast %cst_91 : f32 to vector<32x128xf32>
    %392 = arith.select %388, %390, %391 : vector<32x128xi1>, vector<32x128xf32>
    %393 = arith.addf %386, %392 : vector<32x128xf32>
    %c24_i32 = arith.constant 24 : i32
    %394 = vector.broadcast %c24_i32 : i32 to vector<32x128xi32>
    %395 = arith.cmpi eq, %225, %394 : vector<32x128xi32>
    %c54 = arith.constant 54 : index
    %396 = memref.load %arg1[%c54] : memref<65xf32, #tpu.memory_space<smem>>
    %cst_92 = arith.constant 0.000000e+00 : f32
    %397 = vector.broadcast %396 : f32 to vector<32x128xf32>
    %398 = vector.broadcast %cst_92 : f32 to vector<32x128xf32>
    %399 = arith.select %395, %397, %398 : vector<32x128xi1>, vector<32x128xf32>
    %400 = arith.addf %393, %399 : vector<32x128xf32>
    %c25_i32 = arith.constant 25 : i32
    %401 = vector.broadcast %c25_i32 : i32 to vector<32x128xi32>
    %402 = arith.cmpi eq, %225, %401 : vector<32x128xi32>
    %c55 = arith.constant 55 : index
    %403 = memref.load %arg1[%c55] : memref<65xf32, #tpu.memory_space<smem>>
    %cst_93 = arith.constant 0.000000e+00 : f32
    %404 = vector.broadcast %403 : f32 to vector<32x128xf32>
    %405 = vector.broadcast %cst_93 : f32 to vector<32x128xf32>
    %406 = arith.select %402, %404, %405 : vector<32x128xi1>, vector<32x128xf32>
    %407 = arith.addf %400, %406 : vector<32x128xf32>
    %c26_i32 = arith.constant 26 : i32
    %408 = vector.broadcast %c26_i32 : i32 to vector<32x128xi32>
    %409 = arith.cmpi eq, %225, %408 : vector<32x128xi32>
    %c56 = arith.constant 56 : index
    %410 = memref.load %arg1[%c56] : memref<65xf32, #tpu.memory_space<smem>>
    %cst_94 = arith.constant 0.000000e+00 : f32
    %411 = vector.broadcast %410 : f32 to vector<32x128xf32>
    %412 = vector.broadcast %cst_94 : f32 to vector<32x128xf32>
    %413 = arith.select %409, %411, %412 : vector<32x128xi1>, vector<32x128xf32>
    %414 = arith.addf %407, %413 : vector<32x128xf32>
    %c27_i32 = arith.constant 27 : i32
    %415 = vector.broadcast %c27_i32 : i32 to vector<32x128xi32>
    %416 = arith.cmpi eq, %225, %415 : vector<32x128xi32>
    %c57 = arith.constant 57 : index
    %417 = memref.load %arg1[%c57] : memref<65xf32, #tpu.memory_space<smem>>
    %cst_95 = arith.constant 0.000000e+00 : f32
    %418 = vector.broadcast %417 : f32 to vector<32x128xf32>
    %419 = vector.broadcast %cst_95 : f32 to vector<32x128xf32>
    %420 = arith.select %416, %418, %419 : vector<32x128xi1>, vector<32x128xf32>
    %421 = arith.addf %414, %420 : vector<32x128xf32>
    %c28_i32 = arith.constant 28 : i32
    %422 = vector.broadcast %c28_i32 : i32 to vector<32x128xi32>
    %423 = arith.cmpi eq, %225, %422 : vector<32x128xi32>
    %c58 = arith.constant 58 : index
    %424 = memref.load %arg1[%c58] : memref<65xf32, #tpu.memory_space<smem>>
    %cst_96 = arith.constant 0.000000e+00 : f32
    %425 = vector.broadcast %424 : f32 to vector<32x128xf32>
    %426 = vector.broadcast %cst_96 : f32 to vector<32x128xf32>
    %427 = arith.select %423, %425, %426 : vector<32x128xi1>, vector<32x128xf32>
    %428 = arith.addf %421, %427 : vector<32x128xf32>
    %c29_i32 = arith.constant 29 : i32
    %429 = vector.broadcast %c29_i32 : i32 to vector<32x128xi32>
    %430 = arith.cmpi eq, %225, %429 : vector<32x128xi32>
    %c59 = arith.constant 59 : index
    %431 = memref.load %arg1[%c59] : memref<65xf32, #tpu.memory_space<smem>>
    %cst_97 = arith.constant 0.000000e+00 : f32
    %432 = vector.broadcast %431 : f32 to vector<32x128xf32>
    %433 = vector.broadcast %cst_97 : f32 to vector<32x128xf32>
    %434 = arith.select %430, %432, %433 : vector<32x128xi1>, vector<32x128xf32>
    %435 = arith.addf %428, %434 : vector<32x128xf32>
    %c3_98 = arith.constant 3 : index
    %436 = arith.index_cast %1 : i32 to index
    %c0_99 = arith.constant 0 : index
    %437 = vector.load %arg2[%c3_98, %436, %c0_99] : memref<8x32x128xf32, #tpu.memory_space<vmem>>, vector<1x32x128xf32>
    %438 = vector.shape_cast %437 : vector<1x32x128xf32> to vector<32x128xf32>
    %c60 = arith.constant 60 : index
    %439 = memref.load %arg1[%c60] : memref<65xf32, #tpu.memory_space<smem>>
    %440 = vector.broadcast %439 : f32 to vector<32x128xf32>
    %441 = arith.mulf %438, %440 : vector<32x128xf32>
    %442 = arith.addf %435, %441 : vector<32x128xf32>
    %c4_100 = arith.constant 4 : index
    %443 = arith.index_cast %1 : i32 to index
    %c0_101 = arith.constant 0 : index
    %444 = vector.load %arg2[%c4_100, %443, %c0_101] : memref<8x32x128xf32, #tpu.memory_space<vmem>>, vector<1x32x128xf32>
    %445 = vector.shape_cast %444 : vector<1x32x128xf32> to vector<32x128xf32>
    %c61 = arith.constant 61 : index
    %446 = memref.load %arg1[%c61] : memref<65xf32, #tpu.memory_space<smem>>
    %447 = vector.broadcast %446 : f32 to vector<32x128xf32>
    %448 = arith.mulf %445, %447 : vector<32x128xf32>
    %449 = arith.addf %221, %448 : vector<32x128xf32>
    %c5_102 = arith.constant 5 : index
    %450 = arith.index_cast %1 : i32 to index
    %c0_103 = arith.constant 0 : index
    %451 = vector.load %arg2[%c5_102, %450, %c0_103] : memref<8x32x128xf32, #tpu.memory_space<vmem>>, vector<1x32x128xf32>
    %452 = vector.shape_cast %451 : vector<1x32x128xf32> to vector<32x128xf32>
    %c62 = arith.constant 62 : index
    %453 = memref.load %arg1[%c62] : memref<65xf32, #tpu.memory_space<smem>>
    %454 = vector.broadcast %453 : f32 to vector<32x128xf32>
    %455 = arith.mulf %452, %454 : vector<32x128xf32>
    %456 = arith.addf %442, %455 : vector<32x128xf32>
    %c6_104 = arith.constant 6 : index
    %457 = arith.index_cast %1 : i32 to index
    %c0_105 = arith.constant 0 : index
    %458 = vector.load %arg2[%c6_104, %457, %c0_105] : memref<8x32x128xf32, #tpu.memory_space<vmem>>, vector<1x32x128xf32>
    %459 = vector.shape_cast %458 : vector<1x32x128xf32> to vector<32x128xf32>
    %c63 = arith.constant 63 : index
    %460 = memref.load %arg1[%c63] : memref<65xf32, #tpu.memory_space<smem>>
    %461 = vector.broadcast %460 : f32 to vector<32x128xf32>
    %462 = arith.mulf %459, %461 : vector<32x128xf32>
    %463 = arith.addf %449, %462 : vector<32x128xf32>
    %c7_106 = arith.constant 7 : index
    %464 = arith.index_cast %1 : i32 to index
    %c0_107 = arith.constant 0 : index
    %465 = vector.load %arg2[%c7_106, %464, %c0_107] : memref<8x32x128xf32, #tpu.memory_space<vmem>>, vector<1x32x128xf32>
    %466 = vector.shape_cast %465 : vector<1x32x128xf32> to vector<32x128xf32>
    %c64 = arith.constant 64 : index
    %467 = memref.load %arg1[%c64] : memref<65xf32, #tpu.memory_space<smem>>
    %468 = vector.broadcast %467 : f32 to vector<32x128xf32>
    %469 = arith.mulf %466, %468 : vector<32x128xf32>
    %470 = arith.addf %456, %469 : vector<32x128xf32>
    %471 = arith.addf %470, %463 : vector<32x128xf32>
    %472 = arith.index_cast %1 : i32 to index
    %c0_108 = arith.constant 0 : index
    %473 = vector.load %arg3[%472, %c0_108] : memref<32x128xf32, #tpu.memory_space<vmem>>, vector<32x128xf32>
    tpu.vector_store %arg3[%472, %c0_108], %471 {strides = array<i32>} : memref<32x128xf32, #tpu.memory_space<vmem>>, vector<32x128xf32>,
    %c1_i32_109 = arith.constant 1 : i32
    return
  }
  func.func @transform_0(%arg0: i32) -> i32 {
    %c0_i32 = arith.constant 0 : i32
    %c0_i32_0 = arith.constant 0 : i32
    return %c0_i32 : i32
  }
  func.func @transform_1(%arg0: i32) -> (i32, i32, i32) {
    %c0_i32 = arith.constant 0 : i32
    %c0_i32_0 = arith.constant 0 : i32
    %c0_i32_1 = arith.constant 0 : i32
    return %c0_i32, %arg0, %c0_i32_0 : i32, i32, i32
  }
  func.func @transform_2(%arg0: i32) -> (i32, i32) {
    %c0_i32 = arith.constant 0 : i32
    %c0_i32_0 = arith.constant 0 : i32
    return %arg0, %c0_i32 : i32, i32
  }
}

</mosaic_0001>

<llo_original>
// kernel: tpu_custom_call.1
$region0: #{tpu_custom_call.1}
  #allocation0 [shape = 'u32[]', space=smem, size = 0x4, offset = 0x4, fixed_abs, tag = 'smem constant byte address 0x4 - core index']
  #allocation1 [shape = 'u32[144,128]{1,0:T(1,128)}', space=vmem, size = 0x12000, scoped, tag = 'internal scratch']
  %s0 = inlined_call_operand.hbm [shape: f32[65], index: 0, kind: input, shape index: {}]
  %s1 = inlined_call_operand.hbm [shape: f32[8,32,128], index: 1, kind: input, shape index: {}]
  %s2 = inlined_call_operand.hbm [shape: f32[32,128], index: 2, kind: output, shape index: {}]
  %s3 = sld [smem:[#allocation0]]
  $region26: #{tpu_custom_call.1} parent=0
    _
  %s5 = ssub.s32 1, %s3
  %s6 = scalar_select 0, %s5, %s3
  $region1: #{tpu_custom_call.1} parent=0
    #allocation2 [shape = 'u8[512]{0}', space=smem, size = 0x200, scoped, tag = 'input window, operand 0, single buffered']
    #allocation3 [shape = 's32[1]{0}', space=sflag, size = 0x4, scoped, tag = 'scoped memory for tpu_custom_call.1']
    #allocation4 [shape = 's32[1]{0}', space=sflag, size = 0x4, scoped, tag = 'scoped memory for tpu_custom_call.1']
    #allocation5 [shape = 's32[1]{0}', space=sflag, size = 0x4, scoped, tag = 'scoped memory for tpu_custom_call.1']
    #allocation6 [shape = 'u8[131072]{0}', space=vmem, size = 0x20000, scoped, tag = 'input window, operand 1, single buffered']
    #allocation7 [shape = 'u8[16384]{0}', space=vmem, size = 0x4000, scoped, tag = 'output window, operand 0, single buffered']
    %7 = vsyncpa [#allocation5], 0
    %8 = vsyncpa [#allocation3], 0
    %9 = vsyncpa [#allocation4], 0
    // Predicated region
    $region2: #{tpu_custom_call.1} parent=1 // pred_check
      _
    $region3: #{tpu_custom_call.1} parent=1 // pred_check_branch
      %11 = sbr.rel (0) target = $region5
    $region4: #{tpu_custom_call.1} parent=1 // pred_region
      %s13 = ssub.s32 16, 16
      %14 = vsyncadd [#allocation5], %s13
      %17 = dma.hbm_to_smem %s0, 16, [#allocation2], [#allocation5]
    $region5: #{tpu_custom_call.1} parent=1 // pred_fallthru
      _
    // Predicated region
    $region6: #{tpu_custom_call.1} parent=1 // pred_check
      _
    $region7: #{tpu_custom_call.1} parent=1 // pred_check_branch
      %19 = sbr.rel (0) target = $region9
    $region8: #{tpu_custom_call.1} parent=1 // pred_region
      %s21 = ssub.s32 4096, 4096
      %22 = vsyncadd [#allocation3], %s21
      %s23 = sshll.u32 [#allocation6], 4
      %s24 = int_to_ptr.vmem [resolvable:$true] %s23
      %29 = dma.hbm_to_vmem [thread:$0]  %s1, 4096, %s24, [#allocation3], 128, 128, 8
    $region9: #{tpu_custom_call.1} parent=1 // pred_fallthru
      _
    // Predicated region
    $region10: #{tpu_custom_call.1} parent=1 // pred_check
      _
    $region11: #{tpu_custom_call.1} parent=1 // pred_check_branch
      %31 = sbr.rel (0) target = $region13
    $region12: #{tpu_custom_call.1} parent=1 // pred_region
      %32 = dma.done [#allocation5], 16
    $region13: #{tpu_custom_call.1} parent=1 // pred_fallthru
      _
    // Predicated region
    $region14: #{tpu_custom_call.1} parent=1 // pred_check
      _
    $region15: #{tpu_custom_call.1} parent=1 // pred_check_branch
      %34 = sbr.rel (0) target = $region17
    $region16: #{tpu_custom_call.1} parent=1 // pred_region
      %35 = dma.done [#allocation3], 4096
    $region17: #{tpu_custom_call.1} parent=1 // pred_fallthru
      _
    %36 = sfence
    %v37 = vld [vmem:[#allocation6] sm:$0xff]
    %v38 = vld [vmem:[#allocation6 + $0x8] sm:$0xff]
    %v39 = vld [vmem:[#allocation6 + $0x10] sm:$0xff]
    %v40 = vld [vmem:[#allocation6 + $0x18] sm:$0xff]
    %v41 = vcvt.f32.s32.to.zero.pseudo %v37
    %v42 = vcvt.f32.s32.to.zero.pseudo %v38
    %v43 = vcvt.f32.s32.to.zero.pseudo %v39
    %v44 = vcvt.f32.s32.to.zero.pseudo %v40
    %vm45 = vcmp.eq.s32.totalorder %v41, 0
    %vm46 = vcmp.eq.s32.totalorder %v42, 0
    %vm47 = vcmp.eq.s32.totalorder %v43, 0
    %vm48 = vcmp.eq.s32.totalorder %v44, 0
    %s49 = sld [smem:[#allocation2]]
    %v50 = vstv %s49
    %v51 = vsel %vm45, %v50, 0.0
    %v52 = vsel %vm46, %v50, 0.0
    %v53 = vsel %vm47, %v50, 0.0
    %v54 = vsel %vm48, %v50, 0.0
    %v55 = vadd.f32 %v51, 0.0
    %v56 = vadd.f32 %v52, 0.0
    %v57 = vadd.f32 %v53, 0.0
    %v58 = vadd.f32 %v54, 0.0
    %vm59 = vcmp.eq.s32.totalorder %v41, 1
    %vm60 = vcmp.eq.s32.totalorder %v42, 1
    %vm61 = vcmp.eq.s32.totalorder %v43, 1
    %vm62 = vcmp.eq.s32.totalorder %v44, 1
    %s63 = sld [smem:[#allocation2 + $0x1]]
    %v64 = vstv %s63
    %v65 = vsel %vm59, %v64, 0.0
    %v66 = vsel %vm60, %v64, 0.0
    %v67 = vsel %vm61, %v64, 0.0
    %v68 = vsel %vm62, %v64, 0.0
    %v69 = vadd.f32 %v55, %v65
    %v70 = vadd.f32 %v56, %v66
    %v71 = vadd.f32 %v57, %v67
    %v72 = vadd.f32 %v58, %v68
    %vm73 = vcmp.eq.s32.totalorder %v41, 2
    %vm74 = vcmp.eq.s32.totalorder %v42, 2
    %vm75 = vcmp.eq.s32.totalorder %v43, 2
    %vm76 = vcmp.eq.s32.totalorder %v44, 2
    %s77 = sld [smem:[#allocation2 + $0x2]]
    %v78 = vstv %s77
    %v79 = vsel %vm73, %v78, 0.0
    %v80 = vsel %vm74, %v78, 0.0
    %v81 = vsel %vm75, %v78, 0.0
    %v82 = vsel %vm76, %v78, 0.0
    %v83 = vadd.f32 %v69, %v79
    %v84 = vadd.f32 %v70, %v80
    %v85 = vadd.f32 %v71, %v81
    %v86 = vadd.f32 %v72, %v82
    %vm87 = vcmp.eq.s32.totalorder %v41, 3
    %vm88 = vcmp.eq.s32.totalorder %v42, 3
    %vm89 = vcmp.eq.s32.totalorder %v43, 3
    %vm90 = vcmp.eq.s32.totalorder %v44, 3
    %s91 = sld [smem:[#allocation2 + $0x3]]
    %v92 = vstv %s91
    %v93 = vsel %vm87, %v92, 0.0
    %v94 = vsel %vm88, %v92, 0.0
    %v95 = vsel %vm89, %v92, 0.0
    %v96 = vsel %vm90, %v92, 0.0
    %v97 = vadd.f32 %v83, %v93
    %v98 = vadd.f32 %v84, %v94
    %v99 = vadd.f32 %v85, %v95
    %v100 = vadd.f32 %v86, %v96
    %vm101 = vcmp.eq.s32.totalorder %v41, 4
    %vm102 = vcmp.eq.s32.totalorder %v42, 4
    %vm103 = vcmp.eq.s32.totalorder %v43, 4
    %vm104 = vcmp.eq.s32.totalorder %v44, 4
    %s105 = sld [smem:[#allocation2 + $0x4]]
    %v106 = vstv %s105
    %v107 = vsel %vm101, %v106, 0.0
    %v108 = vsel %vm102, %v106, 0.0
    %v109 = vsel %vm103, %v106, 0.0
    %v110 = vsel %vm104, %v106, 0.0
    %v111 = vadd.f32 %v97, %v107
    %v112 = vadd.f32 %v98, %v108
    %v113 = vadd.f32 %v99, %v109
    %v114 = vadd.f32 %v100, %v110
    %vm115 = vcmp.eq.s32.totalorder %v41, 5
    %vm116 = vcmp.eq.s32.totalorder %v42, 5
    %vm117 = vcmp.eq.s32.totalorder %v43, 5
    %vm118 = vcmp.eq.s32.totalorder %v44, 5
    %s119 = sld [smem:[#allocation2 + $0x5]]
    %v120 = vstv %s119
    %v121 = vsel %vm115, %v120, 0.0
    %v122 = vsel %vm116, %v120, 0.0
    %v123 = vsel %vm117, %v120, 0.0
    %v124 = vsel %vm118, %v120, 0.0
    %v125 = vadd.f32 %v111, %v121
    %v126 = vadd.f32 %v112, %v122
    %v127 = vadd.f32 %v113, %v123
    %v128 = vadd.f32 %v114, %v124
    %vm129 = vcmp.eq.s32.totalorder %v41, 6
    %vm130 = vcmp.eq.s32.totalorder %v42, 6
    %vm131 = vcmp.eq.s32.totalorder %v43, 6
    %vm132 = vcmp.eq.s32.totalorder %v44, 6
    %s133 = sld [smem:[#allocation2 + $0x6]]
    %v134 = vstv %s133
    %v135 = vsel %vm129, %v134, 0.0
    %v136 = vsel %vm130, %v134, 0.0
    %v137 = vsel %vm131, %v134, 0.0
    %v138 = vsel %vm132, %v134, 0.0
    %v139 = vadd.f32 %v125, %v135
    %v140 = vadd.f32 %v126, %v136
    %v141 = vadd.f32 %v127, %v137
    %v142 = vadd.f32 %v128, %v138
    %vm143 = vcmp.eq.s32.totalorder %v41, 7
    %vm144 = vcmp.eq.s32.totalorder %v42, 7
    %vm145 = vcmp.eq.s32.totalorder %v43, 7
    %vm146 = vcmp.eq.s32.totalorder %v44, 7
    %s147 = sld [smem:[#allocation2 + $0x7]]
    %v148 = vstv %s147
    %v149 = vsel %vm143, %v148, 0.0
    %v150 = vsel %vm144, %v148, 0.0
    %v151 = vsel %vm145, %v148, 0.0
    %v152 = vsel %vm146, %v148, 0.0
    %v153 = vadd.f32 %v139, %v149
    %v154 = vadd.f32 %v140, %v150
    %v155 = vadd.f32 %v141, %v151
    %v156 = vadd.f32 %v142, %v152
    %vm157 = vcmp.eq.s32.totalorder %v41, 8
    %vm158 = vcmp.eq.s32.totalorder %v42, 8
    %vm159 = vcmp.eq.s32.totalorder %v43, 8
    %vm160 = vcmp.eq.s32.totalorder %v44, 8
    %s161 = sld [smem:[#allocation2 + $0x8]]
    %v162 = vstv %s161
    %v163 = vsel %vm157, %v162, 0.0
    %v164 = vsel %vm158, %v162, 0.0
    %v165 = vsel %vm159, %v162, 0.0
    %v166 = vsel %vm160, %v162, 0.0
    %v167 = vadd.f32 %v153, %v163
    %v168 = vadd.f32 %v154, %v164
    %v169 = vadd.f32 %v155, %v165
    %v170 = vadd.f32 %v156, %v166
    %vm171 = vcmp.eq.s32.totalorder %v41, 9
    %vm172 = vcmp.eq.s32.totalorder %v42, 9
    %vm173 = vcmp.eq.s32.totalorder %v43, 9
    %vm174 = vcmp.eq.s32.totalorder %v44, 9
    %s175 = sld [smem:[#allocation2 + $0x9]]
    %v176 = vstv %s175
    %v177 = vsel %vm171, %v176, 0.0
    %v178 = vsel %vm172, %v176, 0.0
    %v179 = vsel %vm173, %v176, 0.0
    %v180 = vsel %vm174, %v176, 0.0
    %v181 = vadd.f32 %v167, %v177
    %v182 = vadd.f32 %v168, %v178
    %v183 = vadd.f32 %v169, %v179
    %v184 = vadd.f32 %v170, %v180
    %s185 = sadd.s32 0, 32
    %s186 = scalar_lea.vmem [#allocation6], %s185
    %v187 = vld [vmem:[%s186] sm:$0xff]
    %v188 = vld [vmem:[%s186 + $0x8] sm:$0xff]
    %v189 = vld [vmem:[%s186 + $0x10] sm:$0xff]
    %v190 = vld [vmem:[%s186 + $0x18] sm:$0xff]
    %v191 = vcvt.f32.s32.to.zero.pseudo %v187
    %v192 = vcvt.f32.s32.to.zero.pseudo %v188
    %v193 = vcvt.f32.s32.to.zero.pseudo %v189
    %v194 = vcvt.f32.s32.to.zero.pseudo %v190
    %vm195 = vcmp.eq.s32.totalorder %v191, 0
    %vm196 = vcmp.eq.s32.totalorder %v192, 0
    %vm197 = vcmp.eq.s32.totalorder %v193, 0
    %vm198 = vcmp.eq.s32.totalorder %v194, 0
    %s199 = sld [smem:[#allocation2 + $0xa]]
    %v200 = vstv %s199
    %v201 = vsel %vm195, %v200, 0.0
    %v202 = vsel %vm196, %v200, 0.0
    %v203 = vsel %vm197, %v200, 0.0
    %v204 = vsel %vm198, %v200, 0.0
    %v205 = vadd.f32 %v201, 0.0
    %v206 = vadd.f32 %v202, 0.0
    %v207 = vadd.f32 %v203, 0.0
    %v208 = vadd.f32 %v204, 0.0
    %vm209 = vcmp.eq.s32.totalorder %v191, 1
    %vm210 = vcmp.eq.s32.totalorder %v192, 1
    %vm211 = vcmp.eq.s32.totalorder %v193, 1
    %vm212 = vcmp.eq.s32.totalorder %v194, 1
    %s213 = sld [smem:[#allocation2 + $0xb]]
    %v214 = vstv %s213
    %v215 = vsel %vm209, %v214, 0.0
    %v216 = vsel %vm210, %v214, 0.0
    %v217 = vsel %vm211, %v214, 0.0
    %v218 = vsel %vm212, %v214, 0.0
    %v219 = vadd.f32 %v205, %v215
    %v220 = vadd.f32 %v206, %v216
    %v221 = vadd.f32 %v207, %v217
    %v222 = vadd.f32 %v208, %v218
    %vm223 = vcmp.eq.s32.totalorder %v191, 2
    %vm224 = vcmp.eq.s32.totalorder %v192, 2
    %vm225 = vcmp.eq.s32.totalorder %v193, 2
    %vm226 = vcmp.eq.s32.totalorder %v194, 2
    %s227 = sld [smem:[#allocation2 + $0xc]]
    %v228 = vstv %s227
    %v229 = vsel %vm223, %v228, 0.0
    %v230 = vsel %vm224, %v228, 0.0
    %v231 = vsel %vm225, %v228, 0.0
    %v232 = vsel %vm226, %v228, 0.0
    %v233 = vadd.f32 %v219, %v229
    %v234 = vadd.f32 %v220, %v230
    %v235 = vadd.f32 %v221, %v231
    %v236 = vadd.f32 %v222, %v232
    %vm237 = vcmp.eq.s32.totalorder %v191, 3
    %vm238 = vcmp.eq.s32.totalorder %v192, 3
    %vm239 = vcmp.eq.s32.totalorder %v193, 3
    %vm240 = vcmp.eq.s32.totalorder %v194, 3
    %s241 = sld [smem:[#allocation2 + $0xd]]
    %v242 = vstv %s241
    %v243 = vsel %vm237, %v242, 0.0
    %v244 = vsel %vm238, %v242, 0.0
    %v245 = vsel %vm239, %v242, 0.0
    %v246 = vsel %vm240, %v242, 0.0
    %v247 = vadd.f32 %v233, %v243
    %v248 = vadd.f32 %v234, %v244
    %v249 = vadd.f32 %v235, %v245
    %v250 = vadd.f32 %v236, %v246
    %vm251 = vcmp.eq.s32.totalorder %v191, 4
    %vm252 = vcmp.eq.s32.totalorder %v192, 4
    %vm253 = vcmp.eq.s32.totalorder %v193, 4
    %vm254 = vcmp.eq.s32.totalorder %v194, 4
    %s255 = sld [smem:[#allocation2 + $0xe]]
    %v256 = vstv %s255
    %v257 = vsel %vm251, %v256, 0.0
    %v258 = vsel %vm252, %v256, 0.0
    %v259 = vsel %vm253, %v256, 0.0
    %v260 = vsel %vm254, %v256, 0.0
    %v261 = vadd.f32 %v247, %v257
    %v262 = vadd.f32 %v248, %v258
    %v263 = vadd.f32 %v249, %v259
    %v264 = vadd.f32 %v250, %v260
    %vm265 = vcmp.eq.s32.totalorder %v191, 5
    %vm266 = vcmp.eq.s32.totalorder %v192, 5
    %vm267 = vcmp.eq.s32.totalorder %v193, 5
    %vm268 = vcmp.eq.s32.totalorder %v194, 5
    %s269 = sld [smem:[#allocation2 + $0xf]]
    %v270 = vstv %s269
    %v271 = vsel %vm265, %v270, 0.0
    %v272 = vsel %vm266, %v270, 0.0
    %v273 = vsel %vm267, %v270, 0.0
    %v274 = vsel %vm268, %v270, 0.0
    %v275 = vadd.f32 %v261, %v271
    %v276 = vadd.f32 %v262, %v272
    %v277 = vadd.f32 %v263, %v273
    %v278 = vadd.f32 %v264, %v274
    %vm279 = vcmp.eq.s32.totalorder %v191, 6
    %vm280 = vcmp.eq.s32.totalorder %v192, 6
    %vm281 = vcmp.eq.s32.totalorder %v193, 6
    %vm282 = vcmp.eq.s32.totalorder %v194, 6
    %s283 = sld [smem:[#allocation2 + $0x10]]
    %v284 = vstv %s283
    %v285 = vsel %vm279, %v284, 0.0
    %v286 = vsel %vm280, %v284, 0.0
    %v287 = vsel %vm281, %v284, 0.0
    %v288 = vsel %vm282, %v284, 0.0
    %v289 = vadd.f32 %v275, %v285
    %v290 = vadd.f32 %v276, %v286
    %v291 = vadd.f32 %v277, %v287
    %v292 = vadd.f32 %v278, %v288
    %vm293 = vcmp.eq.s32.totalorder %v191, 7
    %vm294 = vcmp.eq.s32.totalorder %v192, 7
    %vm295 = vcmp.eq.s32.totalorder %v193, 7
    %vm296 = vcmp.eq.s32.totalorder %v194, 7
    %s297 = sld [smem:[#allocation2 + $0x11]]
    %v298 = vstv %s297
    %v299 = vsel %vm293, %v298, 0.0
    %v300 = vsel %vm294, %v298, 0.0
    %v301 = vsel %vm295, %v298, 0.0
    %v302 = vsel %vm296, %v298, 0.0
    %v303 = vadd.f32 %v289, %v299
    %v304 = vadd.f32 %v290, %v300
    %v305 = vadd.f32 %v291, %v301
    %v306 = vadd.f32 %v292, %v302
    %vm307 = vcmp.eq.s32.totalorder %v191, 8
    %vm308 = vcmp.eq.s32.totalorder %v192, 8
    %vm309 = vcmp.eq.s32.totalorder %v193, 8
    %vm310 = vcmp.eq.s32.totalorder %v194, 8
    %s311 = sld [smem:[#allocation2 + $0x12]]
    %v312 = vstv %s311
    %v313 = vsel %vm307, %v312, 0.0
    %v314 = vsel %vm308, %v312, 0.0
    %v315 = vsel %vm309, %v312, 0.0
    %v316 = vsel %vm310, %v312, 0.0
    %v317 = vadd.f32 %v303, %v313
    %v318 = vadd.f32 %v304, %v314
    %v319 = vadd.f32 %v305, %v315
    %v320 = vadd.f32 %v306, %v316
    %vm321 = vcmp.eq.s32.totalorder %v191, 9
    %vm322 = vcmp.eq.s32.totalorder %v192, 9
    %vm323 = vcmp.eq.s32.totalorder %v193, 9
    %vm324 = vcmp.eq.s32.totalorder %v194, 9
    %s325 = sld [smem:[#allocation2 + $0x13]]
    %v326 = vstv %s325
    %v327 = vsel %vm321, %v326, 0.0
    %v328 = vsel %vm322, %v326, 0.0
    %v329 = vsel %vm323, %v326, 0.0
    %v330 = vsel %vm324, %v326, 0.0
    %v331 = vadd.f32 %v317, %v327
    %v332 = vadd.f32 %v318, %v328
    %v333 = vadd.f32 %v319, %v329
    %v334 = vadd.f32 %v320, %v330
    %vm335 = vcmp.eq.s32.totalorder %v191, 10
    %vm336 = vcmp.eq.s32.totalorder %v192, 10
    %vm337 = vcmp.eq.s32.totalorder %v193, 10
    %vm338 = vcmp.eq.s32.totalorder %v194, 10
    %s339 = sld [smem:[#allocation2 + $0x14]]
    %v340 = vstv %s339
    %v341 = vsel %vm335, %v340, 0.0
    %v342 = vsel %vm336, %v340, 0.0
    %v343 = vsel %vm337, %v340, 0.0
    %v344 = vsel %vm338, %v340, 0.0
    %v345 = vadd.f32 %v331, %v341
    %v346 = vadd.f32 %v332, %v342
    %v347 = vadd.f32 %v333, %v343
    %v348 = vadd.f32 %v334, %v344
    %vm349 = vcmp.eq.s32.totalorder %v191, 11
    %vm350 = vcmp.eq.s32.totalorder %v192, 11
    %vm351 = vcmp.eq.s32.totalorder %v193, 11
    %vm352 = vcmp.eq.s32.totalorder %v194, 11
    %s353 = sld [smem:[#allocation2 + $0x15]]
    %v354 = vstv %s353
    %v355 = vsel %vm349, %v354, 0.0
    %v356 = vsel %vm350, %v354, 0.0
    %v357 = vsel %vm351, %v354, 0.0
    %v358 = vsel %vm352, %v354, 0.0
    %v359 = vadd.f32 %v345, %v355
    %v360 = vadd.f32 %v346, %v356
    %v361 = vadd.f32 %v347, %v357
    %v362 = vadd.f32 %v348, %v358
    %vm363 = vcmp.eq.s32.totalorder %v191, 12
    %vm364 = vcmp.eq.s32.totalorder %v192, 12
    %vm365 = vcmp.eq.s32.totalorder %v193, 12
    %vm366 = vcmp.eq.s32.totalorder %v194, 12
    %s367 = sld [smem:[#allocation2 + $0x16]]
    %v368 = vstv %s367
    %v369 = vsel %vm363, %v368, 0.0
    %v370 = vsel %vm364, %v368, 0.0
    %v371 = vsel %vm365, %v368, 0.0
    %v372 = vsel %vm366, %v368, 0.0
    %v373 = vadd.f32 %v359, %v369
    %v374 = vadd.f32 %v360, %v370
    %v375 = vadd.f32 %v361, %v371
    %v376 = vadd.f32 %v362, %v372
    %vm377 = vcmp.eq.s32.totalorder %v191, 13
    %vm378 = vcmp.eq.s32.totalorder %v192, 13
    %vm379 = vcmp.eq.s32.totalorder %v193, 13
    %vm380 = vcmp.eq.s32.totalorder %v194, 13
    %s381 = sld [smem:[#allocation2 + $0x17]]
    %v382 = vstv %s381
    %v383 = vsel %vm377, %v382, 0.0
    %v384 = vsel %vm378, %v382, 0.0
    %v385 = vsel %vm379, %v382, 0.0
    %v386 = vsel %vm380, %v382, 0.0
    %v387 = vadd.f32 %v373, %v383
    %v388 = vadd.f32 %v374, %v384
    %v389 = vadd.f32 %v375, %v385
    %v390 = vadd.f32 %v376, %v386
    %vm391 = vcmp.eq.s32.totalorder %v191, 14
    %vm392 = vcmp.eq.s32.totalorder %v192, 14
    %vm393 = vcmp.eq.s32.totalorder %v193, 14
    %vm394 = vcmp.eq.s32.totalorder %v194, 14
    %s395 = sld [smem:[#allocation2 + $0x18]]
    %v396 = vstv %s395
    %v397 = vsel %vm391, %v396, 0.0
    %v398 = vsel %vm392, %v396, 0.0
    %v399 = vsel %vm393, %v396, 0.0
    %v400 = vsel %vm394, %v396, 0.0
    %v401 = vadd.f32 %v387, %v397
    %v402 = vadd.f32 %v388, %v398
    %v403 = vadd.f32 %v389, %v399
    %v404 = vadd.f32 %v390, %v400
    %vm405 = vcmp.eq.s32.totalorder %v191, 15
    %vm406 = vcmp.eq.s32.totalorder %v192, 15
    %vm407 = vcmp.eq.s32.totalorder %v193, 15
    %vm408 = vcmp.eq.s32.totalorder %v194, 15
    %s409 = sld [smem:[#allocation2 + $0x19]]
    %v410 = vstv %s409
    %v411 = vsel %vm405, %v410, 0.0
    %v412 = vsel %vm406, %v410, 0.0
    %v413 = vsel %vm407, %v410, 0.0
    %v414 = vsel %vm408, %v410, 0.0
    %v415 = vadd.f32 %v401, %v411
    %v416 = vadd.f32 %v402, %v412
    %v417 = vadd.f32 %v403, %v413
    %v418 = vadd.f32 %v404, %v414
    %vm419 = vcmp.eq.s32.totalorder %v191, 16
    %vm420 = vcmp.eq.s32.totalorder %v192, 16
    %vm421 = vcmp.eq.s32.totalorder %v193, 16
    %vm422 = vcmp.eq.s32.totalorder %v194, 16
    %s423 = sld [smem:[#allocation2 + $0x1a]]
    %v424 = vstv %s423
    %v425 = vsel %vm419, %v424, 0.0
    %v426 = vsel %vm420, %v424, 0.0
    %v427 = vsel %vm421, %v424, 0.0
    %v428 = vsel %vm422, %v424, 0.0
    %v429 = vadd.f32 %v415, %v425
    %v430 = vadd.f32 %v416, %v426
    %v431 = vadd.f32 %v417, %v427
    %v432 = vadd.f32 %v418, %v428
    %vm433 = vcmp.eq.s32.totalorder %v191, 17
    %vm434 = vcmp.eq.s32.totalorder %v192, 17
    %vm435 = vcmp.eq.s32.totalorder %v193, 17
    %vm436 = vcmp.eq.s32.totalorder %v194, 17
    %s437 = sld [smem:[#allocation2 + $0x1b]]
    %v438 = vstv %s437
    %v439 = vsel %vm433, %v438, 0.0
    %v440 = vsel %vm434, %v438, 0.0
    %v441 = vsel %vm435, %v438, 0.0
    %v442 = vsel %vm436, %v438, 0.0
    %v443 = vadd.f32 %v429, %v439
    %v444 = vadd.f32 %v430, %v440
    %v445 = vadd.f32 %v431, %v441
    %v446 = vadd.f32 %v432, %v442
    %vm447 = vcmp.eq.s32.totalorder %v191, 18
    %vm448 = vcmp.eq.s32.totalorder %v192, 18
    %vm449 = vcmp.eq.s32.totalorder %v193, 18
    %vm450 = vcmp.eq.s32.totalorder %v194, 18
    %s451 = sld [smem:[#allocation2 + $0x1c]]
    %v452 = vstv %s451
    %v453 = vsel %vm447, %v452, 0.0
    %v454 = vsel %vm448, %v452, 0.0
    %v455 = vsel %vm449, %v452, 0.0
    %v456 = vsel %vm450, %v452, 0.0
    %v457 = vadd.f32 %v443, %v453
    %v458 = vadd.f32 %v444, %v454
    %v459 = vadd.f32 %v445, %v455
    %v460 = vadd.f32 %v446, %v456
    %vm461 = vcmp.eq.s32.totalorder %v191, 19
    %vm462 = vcmp.eq.s32.totalorder %v192, 19
    %vm463 = vcmp.eq.s32.totalorder %v193, 19
    %vm464 = vcmp.eq.s32.totalorder %v194, 19
    %s465 = sld [smem:[#allocation2 + $0x1d]]
    %v466 = vstv %s465
    %v467 = vsel %vm461, %v466, 0.0
    %v468 = vsel %vm462, %v466, 0.0
    %v469 = vsel %vm463, %v466, 0.0
    %v470 = vsel %vm464, %v466, 0.0
    %v471 = vadd.f32 %v457, %v467
    %v472 = vadd.f32 %v458, %v468
    %v473 = vadd.f32 %v459, %v469
    %v474 = vadd.f32 %v460, %v470
    %s475 = sadd.s32 0, 64
    %s476 = scalar_lea.vmem [#allocation6], %s475
    %v477 = vld [vmem:[%s476] sm:$0xff]
    %v478 = vld [vmem:[%s476 + $0x8] sm:$0xff]
    %v479 = vld [vmem:[%s476 + $0x10] sm:$0xff]
    %v480 = vld [vmem:[%s476 + $0x18] sm:$0xff]
    %v481 = vcvt.f32.s32.to.zero.pseudo %v477
    %v482 = vcvt.f32.s32.to.zero.pseudo %v478
    %v483 = vcvt.f32.s32.to.zero.pseudo %v479
    %v484 = vcvt.f32.s32.to.zero.pseudo %v480
    %vm485 = vcmp.eq.s32.totalorder %v481, 0
    %vm486 = vcmp.eq.s32.totalorder %v482, 0
    %vm487 = vcmp.eq.s32.totalorder %v483, 0
    %vm488 = vcmp.eq.s32.totalorder %v484, 0
    %s489 = sld [smem:[#allocation2 + $0x1e]]
    %v490 = vstv %s489
    %v491 = vsel %vm485, %v490, 0.0
    %v492 = vsel %vm486, %v490, 0.0
    %v493 = vsel %vm487, %v490, 0.0
    %v494 = vsel %vm488, %v490, 0.0
    %v495 = vadd.f32 %v181, %v491
    %v496 = vadd.f32 %v182, %v492
    %v497 = vadd.f32 %v183, %v493
    %v498 = vadd.f32 %v184, %v494
    %vm499 = vcmp.eq.s32.totalorder %v481, 1
    %vm500 = vcmp.eq.s32.totalorder %v482, 1
    %vm501 = vcmp.eq.s32.totalorder %v483, 1
    %vm502 = vcmp.eq.s32.totalorder %v484, 1
    %s503 = sld [smem:[#allocation2 + $0x1f]]
    %v504 = vstv %s503
    %v505 = vsel %vm499, %v504, 0.0
    %v506 = vsel %vm500, %v504, 0.0
    %v507 = vsel %vm501, %v504, 0.0
    %v508 = vsel %vm502, %v504, 0.0
    %v509 = vadd.f32 %v495, %v505
    %v510 = vadd.f32 %v496, %v506
    %v511 = vadd.f32 %v497, %v507
    %v512 = vadd.f32 %v498, %v508
    %vm513 = vcmp.eq.s32.totalorder %v481, 2
    %vm514 = vcmp.eq.s32.totalorder %v482, 2
    %vm515 = vcmp.eq.s32.totalorder %v483, 2
    %vm516 = vcmp.eq.s32.totalorder %v484, 2
    %s517 = sld [smem:[#allocation2 + $0x20]]
    %v518 = vstv %s517
    %v519 = vsel %vm513, %v518, 0.0
    %v520 = vsel %vm514, %v518, 0.0
    %v521 = vsel %vm515, %v518, 0.0
    %v522 = vsel %vm516, %v518, 0.0
    %v523 = vadd.f32 %v509, %v519
    %v524 = vadd.f32 %v510, %v520
    %v525 = vadd.f32 %v511, %v521
    %v526 = vadd.f32 %v512, %v522
    %vm527 = vcmp.eq.s32.totalorder %v481, 3
    %vm528 = vcmp.eq.s32.totalorder %v482, 3
    %vm529 = vcmp.eq.s32.totalorder %v483, 3
    %vm530 = vcmp.eq.s32.totalorder %v484, 3
    %s531 = sld [smem:[#allocation2 + $0x21]]
    %v532 = vstv %s531
    %v533 = vsel %vm527, %v532, 0.0
    %v534 = vsel %vm528, %v532, 0.0
    %v535 = vsel %vm529, %v532, 0.0
    %v536 = vsel %vm530, %v532, 0.0
    %v537 = vadd.f32 %v523, %v533
    %v538 = vadd.f32 %v524, %v534
    %v539 = vadd.f32 %v525, %v535
    %v540 = vadd.f32 %v526, %v536
    %vm541 = vcmp.eq.s32.totalorder %v481, 4
    %vm542 = vcmp.eq.s32.totalorder %v482, 4
    %vm543 = vcmp.eq.s32.totalorder %v483, 4
    %vm544 = vcmp.eq.s32.totalorder %v484, 4
    %s545 = sld [smem:[#allocation2 + $0x22]]
    %v546 = vstv %s545
    %v547 = vsel %vm541, %v546, 0.0
    %v548 = vsel %vm542, %v546, 0.0
    %v549 = vsel %vm543, %v546, 0.0
    %v550 = vsel %vm544, %v546, 0.0
    %v551 = vadd.f32 %v537, %v547
    %v552 = vadd.f32 %v538, %v548
    %v553 = vadd.f32 %v539, %v549
    %v554 = vadd.f32 %v540, %v550
    %vm555 = vcmp.eq.s32.totalorder %v481, 5
    %vm556 = vcmp.eq.s32.totalorder %v482, 5
    %vm557 = vcmp.eq.s32.totalorder %v483, 5
    %vm558 = vcmp.eq.s32.totalorder %v484, 5
    %s559 = sld [smem:[#allocation2 + $0x23]]
    %v560 = vstv %s559
    %v561 = vsel %vm555, %v560, 0.0
    %v562 = vsel %vm556, %v560, 0.0
    %v563 = vsel %vm557, %v560, 0.0
    %v564 = vsel %vm558, %v560, 0.0
    %v565 = vadd.f32 %v551, %v561
    %v566 = vadd.f32 %v552, %v562
    %v567 = vadd.f32 %v553, %v563
    %v568 = vadd.f32 %v554, %v564
    %vm569 = vcmp.eq.s32.totalorder %v481, 6
    %vm570 = vcmp.eq.s32.totalorder %v482, 6
    %vm571 = vcmp.eq.s32.totalorder %v483, 6
    %vm572 = vcmp.eq.s32.totalorder %v484, 6
    %s573 = sld [smem:[#allocation2 + $0x24]]
    %v574 = vstv %s573
    %v575 = vsel %vm569, %v574, 0.0
    %v576 = vsel %vm570, %v574, 0.0
    %v577 = vsel %vm571, %v574, 0.0
    %v578 = vsel %vm572, %v574, 0.0
    %v579 = vadd.f32 %v565, %v575
    %v580 = vadd.f32 %v566, %v576
    %v581 = vadd.f32 %v567, %v577
    %v582 = vadd.f32 %v568, %v578
    %vm583 = vcmp.eq.s32.totalorder %v481, 7
    %vm584 = vcmp.eq.s32.totalorder %v482, 7
    %vm585 = vcmp.eq.s32.totalorder %v483, 7
    %vm586 = vcmp.eq.s32.totalorder %v484, 7
    %s587 = sld [smem:[#allocation2 + $0x25]]
    %v588 = vstv %s587
    %v589 = vsel %vm583, %v588, 0.0
    %v590 = vsel %vm584, %v588, 0.0
    %v591 = vsel %vm585, %v588, 0.0
    %v592 = vsel %vm586, %v588, 0.0
    %v593 = vadd.f32 %v579, %v589
    %v594 = vadd.f32 %v580, %v590
    %v595 = vadd.f32 %v581, %v591
    %v596 = vadd.f32 %v582, %v592
    %vm597 = vcmp.eq.s32.totalorder %v481, 8
    %vm598 = vcmp.eq.s32.totalorder %v482, 8
    %vm599 = vcmp.eq.s32.totalorder %v483, 8
    %vm600 = vcmp.eq.s32.totalorder %v484, 8
    %s601 = sld [smem:[#allocation2 + $0x26]]
    %v602 = vstv %s601
    %v603 = vsel %vm597, %v602, 0.0
    %v604 = vsel %vm598, %v602, 0.0
    %v605 = vsel %vm599, %v602, 0.0
    %v606 = vsel %vm600, %v602, 0.0
    %v607 = vadd.f32 %v593, %v603
    %v608 = vadd.f32 %v594, %v604
    %v609 = vadd.f32 %v595, %v605
    %v610 = vadd.f32 %v596, %v606
    %vm611 = vcmp.eq.s32.totalorder %v481, 9
    %vm612 = vcmp.eq.s32.totalorder %v482, 9
    %vm613 = vcmp.eq.s32.totalorder %v483, 9
    %vm614 = vcmp.eq.s32.totalorder %v484, 9
    %s615 = sld [smem:[#allocation2 + $0x27]]
    %v616 = vstv %s615
    %v617 = vsel %vm611, %v616, 0.0
    %v618 = vsel %vm612, %v616, 0.0
    %v619 = vsel %vm613, %v616, 0.0
    %v620 = vsel %vm614, %v616, 0.0
    %v621 = vadd.f32 %v607, %v617
    %v622 = vadd.f32 %v608, %v618
    %v623 = vadd.f32 %v609, %v619
    %v624 = vadd.f32 %v610, %v620
    %vm625 = vcmp.eq.s32.totalorder %v481, 10
    %vm626 = vcmp.eq.s32.totalorder %v482, 10
    %vm627 = vcmp.eq.s32.totalorder %v483, 10
    %vm628 = vcmp.eq.s32.totalorder %v484, 10
    %s629 = sld [smem:[#allocation2 + $0x28]]
    %v630 = vstv %s629
    %v631 = vsel %vm625, %v630, 0.0
    %v632 = vsel %vm626, %v630, 0.0
    %v633 = vsel %vm627, %v630, 0.0
    %v634 = vsel %vm628, %v630, 0.0
    %v635 = vadd.f32 %v621, %v631
    %v636 = vadd.f32 %v622, %v632
    %v637 = vadd.f32 %v623, %v633
    %v638 = vadd.f32 %v624, %v634
    %vm639 = vcmp.eq.s32.totalorder %v481, 11
    %vm640 = vcmp.eq.s32.totalorder %v482, 11
    %vm641 = vcmp.eq.s32.totalorder %v483, 11
    %vm642 = vcmp.eq.s32.totalorder %v484, 11
    %s643 = sld [smem:[#allocation2 + $0x29]]
    %v644 = vstv %s643
    %v645 = vsel %vm639, %v644, 0.0
    %v646 = vsel %vm640, %v644, 0.0
    %v647 = vsel %vm641, %v644, 0.0
    %v648 = vsel %vm642, %v644, 0.0
    %v649 = vadd.f32 %v635, %v645
    %v650 = vadd.f32 %v636, %v646
    %v651 = vadd.f32 %v637, %v647
    %v652 = vadd.f32 %v638, %v648
    %vm653 = vcmp.eq.s32.totalorder %v481, 12
    %vm654 = vcmp.eq.s32.totalorder %v482, 12
    %vm655 = vcmp.eq.s32.totalorder %v483, 12
    %vm656 = vcmp.eq.s32.totalorder %v484, 12
    %s657 = sld [smem:[#allocation2 + $0x2a]]
    %v658 = vstv %s657
    %v659 = vsel %vm653, %v658, 0.0
    %v660 = vsel %vm654, %v658, 0.0
    %v661 = vsel %vm655, %v658, 0.0
    %v662 = vsel %vm656, %v658, 0.0
    %v663 = vadd.f32 %v649, %v659
    %v664 = vadd.f32 %v650, %v660
    %v665 = vadd.f32 %v651, %v661
    %v666 = vadd.f32 %v652, %v662
    %vm667 = vcmp.eq.s32.totalorder %v481, 13
    %vm668 = vcmp.eq.s32.totalorder %v482, 13
    %vm669 = vcmp.eq.s32.totalorder %v483, 13
    %vm670 = vcmp.eq.s32.totalorder %v484, 13
    %s671 = sld [smem:[#allocation2 + $0x2b]]
    %v672 = vstv %s671
    %v673 = vsel %vm667, %v672, 0.0
    %v674 = vsel %vm668, %v672, 0.0
    %v675 = vsel %vm669, %v672, 0.0
    %v676 = vsel %vm670, %v672, 0.0
    %v677 = vadd.f32 %v663, %v673
    %v678 = vadd.f32 %v664, %v674
    %v679 = vadd.f32 %v665, %v675
    %v680 = vadd.f32 %v666, %v676
    %vm681 = vcmp.eq.s32.totalorder %v481, 14
    %vm682 = vcmp.eq.s32.totalorder %v482, 14
    %vm683 = vcmp.eq.s32.totalorder %v483, 14
    %vm684 = vcmp.eq.s32.totalorder %v484, 14
    %s685 = sld [smem:[#allocation2 + $0x2c]]
    %v686 = vstv %s685
    %v687 = vsel %vm681, %v686, 0.0
    %v688 = vsel %vm682, %v686, 0.0
    %v689 = vsel %vm683, %v686, 0.0
    %v690 = vsel %vm684, %v686, 0.0
    %v691 = vadd.f32 %v677, %v687
    %v692 = vadd.f32 %v678, %v688
    %v693 = vadd.f32 %v679, %v689
    %v694 = vadd.f32 %v680, %v690
    %vm695 = vcmp.eq.s32.totalorder %v481, 15
    %vm696 = vcmp.eq.s32.totalorder %v482, 15
    %vm697 = vcmp.eq.s32.totalorder %v483, 15
    %vm698 = vcmp.eq.s32.totalorder %v484, 15
    %s699 = sld [smem:[#allocation2 + $0x2d]]
    %v700 = vstv %s699
    %v701 = vsel %vm695, %v700, 0.0
    %v702 = vsel %vm696, %v700, 0.0
    %v703 = vsel %vm697, %v700, 0.0
    %v704 = vsel %vm698, %v700, 0.0
    %v705 = vadd.f32 %v691, %v701
    %v706 = vadd.f32 %v692, %v702
    %v707 = vadd.f32 %v693, %v703
    %v708 = vadd.f32 %v694, %v704
    %vm709 = vcmp.eq.s32.totalorder %v481, 16
    %vm710 = vcmp.eq.s32.totalorder %v482, 16
    %vm711 = vcmp.eq.s32.totalorder %v483, 16
    %vm712 = vcmp.eq.s32.totalorder %v484, 16
    %s713 = sld [smem:[#allocation2 + $0x2e]]
    %v714 = vstv %s713
    %v715 = vsel %vm709, %v714, 0.0
    %v716 = vsel %vm710, %v714, 0.0
    %v717 = vsel %vm711, %v714, 0.0
    %v718 = vsel %vm712, %v714, 0.0
    %v719 = vadd.f32 %v705, %v715
    %v720 = vadd.f32 %v706, %v716
    %v721 = vadd.f32 %v707, %v717
    %v722 = vadd.f32 %v708, %v718
    %vm723 = vcmp.eq.s32.totalorder %v481, 17
    %vm724 = vcmp.eq.s32.totalorder %v482, 17
    %vm725 = vcmp.eq.s32.totalorder %v483, 17
    %vm726 = vcmp.eq.s32.totalorder %v484, 17
    %s727 = sld [smem:[#allocation2 + $0x2f]]
    %v728 = vstv %s727
    %v729 = vsel %vm723, %v728, 0.0
    %v730 = vsel %vm724, %v728, 0.0
    %v731 = vsel %vm725, %v728, 0.0
    %v732 = vsel %vm726, %v728, 0.0
    %v733 = vadd.f32 %v719, %v729
    %v734 = vadd.f32 %v720, %v730
    %v735 = vadd.f32 %v721, %v731
    %v736 = vadd.f32 %v722, %v732
    %vm737 = vcmp.eq.s32.totalorder %v481, 18
    %vm738 = vcmp.eq.s32.totalorder %v482, 18
    %vm739 = vcmp.eq.s32.totalorder %v483, 18
    %vm740 = vcmp.eq.s32.totalorder %v484, 18
    %s741 = sld [smem:[#allocation2 + $0x30]]
    %v742 = vstv %s741
    %v743 = vsel %vm737, %v742, 0.0
    %v744 = vsel %vm738, %v742, 0.0
    %v745 = vsel %vm739, %v742, 0.0
    %v746 = vsel %vm740, %v742, 0.0
    %v747 = vadd.f32 %v733, %v743
    %v748 = vadd.f32 %v734, %v744
    %v749 = vadd.f32 %v735, %v745
    %v750 = vadd.f32 %v736, %v746
    %vm751 = vcmp.eq.s32.totalorder %v481, 19
    %vm752 = vcmp.eq.s32.totalorder %v482, 19
    %vm753 = vcmp.eq.s32.totalorder %v483, 19
    %vm754 = vcmp.eq.s32.totalorder %v484, 19
    %s755 = sld [smem:[#allocation2 + $0x31]]
    %v756 = vstv %s755
    %v757 = vsel %vm751, %v756, 0.0
    %v758 = vsel %vm752, %v756, 0.0
    %v759 = vsel %vm753, %v756, 0.0
    %v760 = vsel %vm754, %v756, 0.0
    %v761 = vadd.f32 %v747, %v757
    %v762 = vadd.f32 %v748, %v758
    %v763 = vadd.f32 %v749, %v759
    %v764 = vadd.f32 %v750, %v760
    %vm765 = vcmp.eq.s32.totalorder %v481, 20
    %vm766 = vcmp.eq.s32.totalorder %v482, 20
    %vm767 = vcmp.eq.s32.totalorder %v483, 20
    %vm768 = vcmp.eq.s32.totalorder %v484, 20
    %s769 = sld [smem:[#allocation2 + $0x32]]
    %v770 = vstv %s769
    %v771 = vsel %vm765, %v770, 0.0
    %v772 = vsel %vm766, %v770, 0.0
    %v773 = vsel %vm767, %v770, 0.0
    %v774 = vsel %vm768, %v770, 0.0
    %v775 = vadd.f32 %v761, %v771
    %v776 = vadd.f32 %v762, %v772
    %v777 = vadd.f32 %v763, %v773
    %v778 = vadd.f32 %v764, %v774
    %vm779 = vcmp.eq.s32.totalorder %v481, 21
    %vm780 = vcmp.eq.s32.totalorder %v482, 21
    %vm781 = vcmp.eq.s32.totalorder %v483, 21
    %vm782 = vcmp.eq.s32.totalorder %v484, 21
    %s783 = sld [smem:[#allocation2 + $0x33]]
    %v784 = vstv %s783
    %v785 = vsel %vm779, %v784, 0.0
    %v786 = vsel %vm780, %v784, 0.0
    %v787 = vsel %vm781, %v784, 0.0
    %v788 = vsel %vm782, %v784, 0.0
    %v789 = vadd.f32 %v775, %v785
    %v790 = vadd.f32 %v776, %v786
    %v791 = vadd.f32 %v777, %v787
    %v792 = vadd.f32 %v778, %v788
    %vm793 = vcmp.eq.s32.totalorder %v481, 22
    %vm794 = vcmp.eq.s32.totalorder %v482, 22
    %vm795 = vcmp.eq.s32.totalorder %v483, 22
    %vm796 = vcmp.eq.s32.totalorder %v484, 22
    %s797 = sld [smem:[#allocation2 + $0x34]]
    %v798 = vstv %s797
    %v799 = vsel %vm793, %v798, 0.0
    %v800 = vsel %vm794, %v798, 0.0
    %v801 = vsel %vm795, %v798, 0.0
    %v802 = vsel %vm796, %v798, 0.0
    %v803 = vadd.f32 %v789, %v799
    %v804 = vadd.f32 %v790, %v800
    %v805 = vadd.f32 %v791, %v801
    %v806 = vadd.f32 %v792, %v802
    %vm807 = vcmp.eq.s32.totalorder %v481, 23
    %vm808 = vcmp.eq.s32.totalorder %v482, 23
    %vm809 = vcmp.eq.s32.totalorder %v483, 23
    %vm810 = vcmp.eq.s32.totalorder %v484, 23
    %s811 = sld [smem:[#allocation2 + $0x35]]
    %v812 = vstv %s811
    %v813 = vsel %vm807, %v812, 0.0
    %v814 = vsel %vm808, %v812, 0.0
    %v815 = vsel %vm809, %v812, 0.0
    %v816 = vsel %vm810, %v812, 0.0
    %v817 = vadd.f32 %v803, %v813
    %v818 = vadd.f32 %v804, %v814
    %v819 = vadd.f32 %v805, %v815
    %v820 = vadd.f32 %v806, %v816
    %vm821 = vcmp.eq.s32.totalorder %v481, 24
    %vm822 = vcmp.eq.s32.totalorder %v482, 24
    %vm823 = vcmp.eq.s32.totalorder %v483, 24
    %vm824 = vcmp.eq.s32.totalorder %v484, 24
    %s825 = sld [smem:[#allocation2 + $0x36]]
    %v826 = vstv %s825
    %v827 = vsel %vm821, %v826, 0.0
    %v828 = vsel %vm822, %v826, 0.0
    %v829 = vsel %vm823, %v826, 0.0
    %v830 = vsel %vm824, %v826, 0.0
    %v831 = vadd.f32 %v817, %v827
    %v832 = vadd.f32 %v818, %v828
    %v833 = vadd.f32 %v819, %v829
    %v834 = vadd.f32 %v820, %v830
    %vm835 = vcmp.eq.s32.totalorder %v481, 25
    %vm836 = vcmp.eq.s32.totalorder %v482, 25
    %vm837 = vcmp.eq.s32.totalorder %v483, 25
    %vm838 = vcmp.eq.s32.totalorder %v484, 25
    %s839 = sld [smem:[#allocation2 + $0x37]]
    %v840 = vstv %s839
    %v841 = vsel %vm835, %v840, 0.0
    %v842 = vsel %vm836, %v840, 0.0
    %v843 = vsel %vm837, %v840, 0.0
    %v844 = vsel %vm838, %v840, 0.0
    %v845 = vadd.f32 %v831, %v841
    %v846 = vadd.f32 %v832, %v842
    %v847 = vadd.f32 %v833, %v843
    %v848 = vadd.f32 %v834, %v844
    %vm849 = vcmp.eq.s32.totalorder %v481, 26
    %vm850 = vcmp.eq.s32.totalorder %v482, 26
    %vm851 = vcmp.eq.s32.totalorder %v483, 26
    %vm852 = vcmp.eq.s32.totalorder %v484, 26
    %s853 = sld [smem:[#allocation2 + $0x38]]
    %v854 = vstv %s853
    %v855 = vsel %vm849, %v854, 0.0
    %v856 = vsel %vm850, %v854, 0.0
    %v857 = vsel %vm851, %v854, 0.0
    %v858 = vsel %vm852, %v854, 0.0
    %v859 = vadd.f32 %v845, %v855
    %v860 = vadd.f32 %v846, %v856
    %v861 = vadd.f32 %v847, %v857
    %v862 = vadd.f32 %v848, %v858
    %vm863 = vcmp.eq.s32.totalorder %v481, 27
    %vm864 = vcmp.eq.s32.totalorder %v482, 27
    %vm865 = vcmp.eq.s32.totalorder %v483, 27
    %vm866 = vcmp.eq.s32.totalorder %v484, 27
    %s867 = sld [smem:[#allocation2 + $0x39]]
    %v868 = vstv %s867
    %v869 = vsel %vm863, %v868, 0.0
    %v870 = vsel %vm864, %v868, 0.0
    %v871 = vsel %vm865, %v868, 0.0
    %v872 = vsel %vm866, %v868, 0.0
    %v873 = vadd.f32 %v859, %v869
    %v874 = vadd.f32 %v860, %v870
    %v875 = vadd.f32 %v861, %v871
    %v876 = vadd.f32 %v862, %v872
    %vm877 = vcmp.eq.s32.totalorder %v481, 28
    %vm878 = vcmp.eq.s32.totalorder %v482, 28
    %vm879 = vcmp.eq.s32.totalorder %v483, 28
    %vm880 = vcmp.eq.s32.totalorder %v484, 28
    %s881 = sld [smem:[#allocation2 + $0x3a]]
    %v882 = vstv %s881
    %v883 = vsel %vm877, %v882, 0.0
    %v884 = vsel %vm878, %v882, 0.0
    %v885 = vsel %vm879, %v882, 0.0
    %v886 = vsel %vm880, %v882, 0.0
    %v887 = vadd.f32 %v873, %v883
    %v888 = vadd.f32 %v874, %v884
    %v889 = vadd.f32 %v875, %v885
    %v890 = vadd.f32 %v876, %v886
    %vm891 = vcmp.eq.s32.totalorder %v481, 29
    %vm892 = vcmp.eq.s32.totalorder %v482, 29
    %vm893 = vcmp.eq.s32.totalorder %v483, 29
    %vm894 = vcmp.eq.s32.totalorder %v484, 29
    %s895 = sld [smem:[#allocation2 + $0x3b]]
    %v896 = vstv %s895
    %v897 = vsel %vm891, %v896, 0.0
    %v898 = vsel %vm892, %v896, 0.0
    %v899 = vsel %vm893, %v896, 0.0
    %v900 = vsel %vm894, %v896, 0.0
    %v901 = vadd.f32 %v887, %v897
    %v902 = vadd.f32 %v888, %v898
    %v903 = vadd.f32 %v889, %v899
    %v904 = vadd.f32 %v890, %v900
    %s905 = sadd.s32 0, 96
    %s906 = scalar_lea.vmem [#allocation6], %s905
    %v907 = vld [vmem:[%s906] sm:$0xff]
    %v908 = vld [vmem:[%s906 + $0x8] sm:$0xff]
    %v909 = vld [vmem:[%s906 + $0x10] sm:$0xff]
    %v910 = vld [vmem:[%s906 + $0x18] sm:$0xff]
    %s911 = sld [smem:[#allocation2 + $0x3c]]
    %v912 = vstv %s911
    %v913 = vmul.f32 %v907, %v912
    %v914 = vmul.f32 %v908, %v912
    %v915 = vmul.f32 %v909, %v912
    %v916 = vmul.f32 %v910, %v912
    %v917 = vadd.f32 %v901, %v913
    %v918 = vadd.f32 %v902, %v914
    %v919 = vadd.f32 %v903, %v915
    %v920 = vadd.f32 %v904, %v916
    %s921 = sadd.s32 0, 128
    %s922 = scalar_lea.vmem [#allocation6], %s921
    %v923 = vld [vmem:[%s922] sm:$0xff]
    %v924 = vld [vmem:[%s922 + $0x8] sm:$0xff]
    %v925 = vld [vmem:[%s922 + $0x10] sm:$0xff]
    %v926 = vld [vmem:[%s922 + $0x18] sm:$0xff]
    %s927 = sld [smem:[#allocation2 + $0x3d]]
    %v928 = vstv %s927
    %v929 = vmul.f32 %v923, %v928
    %v930 = vmul.f32 %v924, %v928
    %v931 = vmul.f32 %v925, %v928
    %v932 = vmul.f32 %v926, %v928
    %v933 = vadd.f32 %v471, %v929
    %v934 = vadd.f32 %v472, %v930
    %v935 = vadd.f32 %v473, %v931
    %v936 = vadd.f32 %v474, %v932
    %s937 = sadd.s32 0, 160
    %s938 = scalar_lea.vmem [#allocation6], %s937
    %v939 = vld [vmem:[%s938] sm:$0xff]
    %v940 = vld [vmem:[%s938 + $0x8] sm:$0xff]
    %v941 = vld [vmem:[%s938 + $0x10] sm:$0xff]
    %v942 = vld [vmem:[%s938 + $0x18] sm:$0xff]
    %s943 = sld [smem:[#allocation2 + $0x3e]]
    %v944 = vstv %s943
    %v945 = vmul.f32 %v939, %v944
    %v946 = vmul.f32 %v940, %v944
    %v947 = vmul.f32 %v941, %v944
    %v948 = vmul.f32 %v942, %v944
    %v949 = vadd.f32 %v917, %v945
    %v950 = vadd.f32 %v918, %v946
    %v951 = vadd.f32 %v919, %v947
    %v952 = vadd.f32 %v920, %v948
    %s953 = sadd.s32 0, 192
    %s954 = scalar_lea.vmem [#allocation6], %s953
    %v955 = vld [vmem:[%s954] sm:$0xff]
    %v956 = vld [vmem:[%s954 + $0x8] sm:$0xff]
    %v957 = vld [vmem:[%s954 + $0x10] sm:$0xff]
    %v958 = vld [vmem:[%s954 + $0x18] sm:$0xff]
    %s959 = sld [smem:[#allocation2 + $0x3f]]
    %v960 = vstv %s959
    %v961 = vmul.f32 %v955, %v960
    %v962 = vmul.f32 %v956, %v960
    %v963 = vmul.f32 %v957, %v960
    %v964 = vmul.f32 %v958, %v960
    %v965 = vadd.f32 %v933, %v961
    %v966 = vadd.f32 %v934, %v962
    %v967 = vadd.f32 %v935, %v963
    %v968 = vadd.f32 %v936, %v964
    %s969 = sadd.s32 0, 224
    %s970 = scalar_lea.vmem [#allocation6], %s969
    %v971 = vld [vmem:[%s970] sm:$0xff]
    %v972 = vld [vmem:[%s970 + $0x8] sm:$0xff]
    %v973 = vld [vmem:[%s970 + $0x10] sm:$0xff]
    %v974 = vld [vmem:[%s970 + $0x18] sm:$0xff]
    %s975 = sld [smem:[#allocation2 + $0x40]]
    %v976 = vstv %s975
    %v977 = vmul.f32 %v971, %v976
    %v978 = vmul.f32 %v972, %v976
    %v979 = vmul.f32 %v973, %v976
    %v980 = vmul.f32 %v974, %v976
    %v981 = vadd.f32 %v949, %v977
    %v982 = vadd.f32 %v950, %v978
    %v983 = vadd.f32 %v951, %v979
    %v984 = vadd.f32 %v952, %v980
    %v985 = vadd.f32 %v981, %v965
    %v986 = vadd.f32 %v982, %v966
    %v987 = vadd.f32 %v983, %v967
    %v988 = vadd.f32 %v984, %v968
    %989 = vst [vmem:[#allocation7] sm:$0xff] %v985
    %990 = vst [vmem:[#allocation7 + $0x8] sm:$0xff] %v986
    %991 = vst [vmem:[#allocation7 + $0x10] sm:$0xff] %v987
    %992 = vst [vmem:[#allocation7 + $0x18] sm:$0xff] %v988
    // Predicated region
    $region18: #{tpu_custom_call.1} parent=1 // pred_check
      _
    $region19: #{tpu_custom_call.1} parent=1 // pred_check_branch
      %994 = sbr.rel (0) target = $region21
    $region20: #{tpu_custom_call.1} parent=1 // pred_region
      %s996 = ssub.s32 512, 512
      %997 = vsyncadd [#allocation4], %s996
      %s998 = sshll.u32 [#allocation7], 4
      %s999 = int_to_ptr.vmem [resolvable:$true] %s998
      %1004 = dma.vmem_to_hbm [thread:$0]  %s999, 512, %s2, [#allocation4], 128, 128, 8
    $region21: #{tpu_custom_call.1} parent=1 // pred_fallthru
      _
    // Predicated region
    $region22: #{tpu_custom_call.1} parent=1 // pred_check
      _
    $region23: #{tpu_custom_call.1} parent=1 // pred_check_branch
      %1006 = sbr.rel (0) target = $region25
    $region24: #{tpu_custom_call.1} parent=1 // pred_region
      %1007 = dma.done [#allocation4], 512
    $region25: #{tpu_custom_call.1} parent=1 // pred_fallthru
      _
    %1008 = vsyncpa [#allocation3], 1
    %1009 = vsyncpa [#allocation4], 1
    %1010 = vsyncpa [#allocation5], 1

</llo_original>
